<compile_context>
chip_gen: v7x
topology: tpu7x:2x2x1
jax: 0.10.0
libtpu: 0.0.40
codegen_flags: <defaults>
</compile_context>

<pallas_src>
import math
import jax
import jax.numpy as jnp
from jax import lax
from jax.experimental import pallas as pl
from jax.experimental.pallas import tpu as pltpu

# ---------------- scaled-down config (consistent with LLMconfig: typ='gqa', pos_emb='rope') ----
B_SZ   = 2                      # batch
T_SEQ  = 16                     # sequence length (block_size)
C_EMB  = 128                    # n_embd
N_HEAD = 4                      # n_head
N_KV   = 2                      # n_kv_heads
HS     = C_EMB // N_HEAD        # head size = 32
KVC    = N_KV * HS              # kv projection width = 64
QKV    = C_EMB + 2 * KVC        # fused c_attn output width = 256
NEG    = -1e30                  # additive causal-mask value


# ------------------------------------------------------------------ Pallas kernel
def gqa_kernel(x_ref, wqkv_ref, bqkv_ref, wproj_ref, bproj_ref,
               cosq_ref, sinq_ref, cosk_ref, sink_ref,
               rotq_ref, rotk_ref, mask_ref,
               y_ref, kv_ref):
    xb = x_ref[0]                                     # (M, C) bf16 (cast in wrapper)

    # ---- fused QKV projection (lane-dense, weight pre-transposed to (C, QKV)) ----
    qkv = jnp.dot(xb, wqkv_ref[...],
                  preferred_element_type=jnp.float32) + bqkv_ref[...]   # (M, 256) f32
    q = qkv[:, :C_EMB]                                # (M, 128)  head-major
    k = qkv[:, C_EMB:C_EMB + KVC]                     # (M, 64)   kv-head-major
    v = qkv[:, C_EMB + KVC:]                          # (M, 64)

    # ---- RoPE (interleaved pairs), batched over all heads ----
    #   roped = x*cos + (x @ R)*sin ; 1/sqrt(HS) scale already folded into cosq/sinq
    q = (q * cosq_ref[...] +
         jnp.dot(q.astype(jnp.bfloat16), rotq_ref[...],
                 preferred_element_type=jnp.float32) * sinq_ref[...])   # (M, 128)
    k = (k * cosk_ref[...] +
         jnp.dot(k.astype(jnp.bfloat16), rotk_ref[...],
                 preferred_element_type=jnp.float32) * sink_ref[...])   # (M, 64)

    # ---- single bf16 cast of the attention operands (hoisted out of head loop) ----
    qb = q.astype(jnp.bfloat16)
    kb = k.astype(jnp.bfloat16)
    vb = v.astype(jnp.bfloat16)

    # ---- packed kv-cache output: one lane-dense (M, 128) bf16 store ----
    kv_ref[0] = jnp.concatenate([kb, vb], axis=-1).astype(kv_ref.dtype)

    # ---- head-batched grouped-query attention ----
    R = N_HEAD // N_KV
    # stack static lane slices along a new leading (head) axis; kv heads are
    # repeated per group via the h // R slice (no jnp.repeat / lane reshape)
    q3 = jnp.stack([qb[:, h * HS:(h + 1) * HS] for h in range(N_HEAD)], axis=0)          # (H, M, HS)
    k3 = jnp.stack([kb[:, (h // R) * HS:((h // R) + 1) * HS] for h in range(N_HEAD)], 0)  # (H, M, HS)
    v3 = jnp.stack([vb[:, (h // R) * HS:((h // R) + 1) * HS] for h in range(N_HEAD)], 0)  # (H, M, HS)

    s = jnp.einsum('hqd,hkd->hqk', q3, k3,
                   preferred_element_type=jnp.float32)                                    # (H, M, M)
    l = s + mask_ref[...][None, :, :]                  # additive causal (block-diag) mask, f32
    m = jnp.max(l, axis=-1, keepdims=True)
    p = jnp.exp(l - m)
    p = p * pl.reciprocal(jnp.sum(p, axis=-1, keepdims=True), approx=True)
    y3 = jnp.einsum('hqk,hkd->hqd', p.astype(jnp.bfloat16), v3,
                    preferred_element_type=jnp.float32)                                   # (H, M, HS)

    # ---- merge heads lane-dense; single output-projection matmul ----
    y2 = jnp.concatenate([y3[h] for h in range(N_HEAD)], axis=-1).astype(jnp.bfloat16)    # (M, 128)
    y_ref[0] = (jnp.dot(y2, wproj_ref[...], preferred_element_type=jnp.float32)
                + bproj_ref[...]).astype(y_ref.dtype)


# ------------------------------------------------------------------ chip heuristic
def _single_tensorcore():
    """True on single-TensorCore chips (v5e / v6e), where folding B into one grid
    step wins; False on dual-core chips (v7x), where grid=(B,) keeps both cores busy."""
    try:
        kind = jax.devices()[0].device_kind.lower()
    except Exception:
        return False
    return any(t in kind for t in ("v5e", "v5 lite", "v5litepod", "v6e", "v6 lite"))


# ------------------------------------------------------------------ wrapper
def gqa_forward(x, w_attn, b_attn, w_proj, b_proj, cos2, sin2, fold_batch=None):
    """w_attn: (QKV, C) / w_proj: (C, C) in torch nn.Linear layout.
    Returns (y, (k_cache, v_cache)) with torch shapes."""
    if fold_batch is None:
        fold_batch = _single_tensorcore()
    scale = 1.0 / math.sqrt(HS)

    # per-head pair-duplicated cos/sin, tiled across heads; scale folded into q tables
    cos_h = jnp.repeat(cos2, 2, axis=-1)              # (T, HS)
    sin_h = jnp.repeat(sin2, 2, axis=-1)
    cosq = jnp.tile(cos_h, (1, N_HEAD)) * scale       # (T, C)
    sinq = jnp.tile(sin_h, (1, N_HEAD)) * scale
    cosk = jnp.tile(cos_h, (1, N_KV))                 # (T, KVC)
    sink = jnp.tile(sin_h, (1, N_KV))

    # pair-rotation matrix R: (x @ R)[2i] = -x[2i+1], (x @ R)[2i+1] = x[2i]
    def rotmat(d):
        r = jnp.zeros((d, d), jnp.float32)
        ev = jnp.arange(0, d, 2)
        r = r.at[ev + 1, ev].set(-1.0)
        r = r.at[ev, ev + 1].set(1.0)
        return r.astype(jnp.bfloat16)

    rotq = rotmat(C_EMB)
    rotk = rotmat(KVC)

    if fold_batch:
        # single grid step: (B*T, C) rows, block-diagonal causal mask
        G, M = 1, B_SZ * T_SEQ
        xk = x.reshape(G, M, C_EMB).astype(jnp.bfloat16)
        cosq_k, sinq_k = jnp.tile(cosq, (B_SZ, 1)), jnp.tile(sinq, (B_SZ, 1))
        cosk_k, sink_k = jnp.tile(cosk, (B_SZ, 1)), jnp.tile(sink, (B_SZ, 1))
        bidx = jnp.arange(M) // T_SEQ
        tpos = jnp.arange(M) % T_SEQ
        allowed = (bidx[:, None] == bidx[None, :]) & (tpos[:, None] >= tpos[None, :])
        mask = jnp.where(allowed, 0.0, NEG).astype(jnp.float32)
    else:
        # one grid step per batch element (maps to the 2 TensorCores on v7x)
        G, M = B_SZ, T_SEQ
        xk = x.astype(jnp.bfloat16)
        cosq_k, sinq_k, cosk_k, sink_k = cosq, sinq, cosk, sink
        causal = jnp.arange(T_SEQ)[:, None] >= jnp.arange(T_SEQ)[None, :]
        mask = jnp.where(causal, 0.0, NEG).astype(jnp.float32)

    # pre-transpose weights to (in_features, out_features); bf16 matmul operands
    wqkv_t = w_attn.T.astype(jnp.bfloat16)            # (C, QKV)
    wproj_t = w_proj.T.astype(jnp.bfloat16)           # (C, C)
    bqkv = b_attn.reshape(1, QKV).astype(jnp.float32)
    bproj = b_proj.reshape(1, C_EMB).astype(jnp.float32)

    full = lambda shape: pl.BlockSpec(shape, lambda g: (0,) * len(shape))
    per_g = lambda shape: pl.BlockSpec((1,) + shape, lambda g: (g,) + (0,) * len(shape))

    in_specs = [
        per_g((M, C_EMB)),            # x (bf16)
        full((C_EMB, QKV)),           # W_qkv (pre-transposed)
        full((1, QKV)),               # b_qkv
        full((C_EMB, C_EMB)),         # W_proj (pre-transposed)
        full((1, C_EMB)),             # b_proj
        full((M, C_EMB)),             # cos_q (scale folded)
        full((M, C_EMB)),             # sin_q (scale folded)
        full((M, KVC)),               # cos_k
        full((M, KVC)),               # sin_k
        full((C_EMB, C_EMB)),         # rot_q
        full((KVC, KVC)),             # rot_k
        full((M, M)),                 # additive causal mask
    ]
    out_specs = [per_g((M, C_EMB)), per_g((M, 2 * KVC))]
    out_shapes = (
        jax.ShapeDtypeStruct((G, M, C_EMB), jnp.bfloat16),
        jax.ShapeDtypeStruct((G, M, 2 * KVC), jnp.bfloat16),
    )

    y, kv_packed = pl.pallas_call(
        gqa_kernel,
        out_shape=out_shapes,
        grid=(G,),
        in_specs=in_specs,
        out_specs=out_specs,
        compiler_params=pltpu.CompilerParams(dimension_semantics=("parallel",)),
    )(xk, wqkv_t, bqkv, wproj_t, bproj,
      cosq_k, sinq_k, cosk_k, sink_k, rotq, rotk, mask)

    # upcast / unpack outside the kernel (downstream comparison is f32)
    y = y.reshape(B_SZ, T_SEQ, C_EMB).astype(jnp.float32)
    kv_packed = kv_packed.reshape(B_SZ, T_SEQ, 2 * KVC).astype(jnp.float32)
    k_cache = kv_packed[:, :, :KVC].reshape(B_SZ, T_SEQ, N_KV, HS).transpose(0, 2, 1, 3)
    v_cache = kv_packed[:, :, KVC:].reshape(B_SZ, T_SEQ, N_KV, HS).transpose(0, 2, 1, 3)
    return y, (k_cache, v_cache)


# ------------------------------------------------------------------ pure-JAX reference (f32)
def gqa_reference(x, w_attn, b_attn, w_proj, b_proj, cos2, sin2):
    def rope(t):  # (B, T, H, D) interleaved pairs
        Bv, Tv, Hv, Dv = t.shape
        tr = t.reshape(Bv, Tv, Hv, Dv // 2, 2)
        re, im = tr[..., 0], tr[..., 1]
        c = cos2[None, :, None, :]
        s = sin2[None, :, None, :]
        return jnp.stack([re * c - im * s, re * s + im * c], axis=-1).reshape(Bv, Tv, Hv, Dv)

    qkv = x @ w_attn.T + b_attn
    q = qkv[..., :C_EMB].reshape(B_SZ, T_SEQ, N_HEAD, HS)
    k = qkv[..., C_EMB:C_EMB + KVC].reshape(B_SZ, T_SEQ, N_KV, HS)
    v = qkv[..., C_EMB + KVC:].reshape(B_SZ, T_SEQ, N_KV, HS).transpose(0, 2, 1, 3)
    q = rope(q).transpose(0, 2, 1, 3)
    k = rope(k).transpose(0, 2, 1, 3)
    kv_cache = (k, v)
    rep = N_HEAD // N_KV
    k_r = jnp.repeat(k, rep, axis=1)
    v_r = jnp.repeat(v, rep, axis=1)
    att = (q @ jnp.swapaxes(k_r, -1, -2)) / math.sqrt(HS)
    causal = jnp.arange(T_SEQ)[:, None] >= jnp.arange(T_SEQ)[None, :]
    att = jnp.where(causal[None, None], att, -jnp.inf)
    att = jax.nn.softmax(att, axis=-1)
    y = (att @ v_r).transpose(0, 2, 1, 3).reshape(B_SZ, T_SEQ, C_EMB)
    y = y @ w_proj.T + b_proj
    return y, kv_cache


# ------------------------------------------------------------------ main
if __name__ == "__main__":
    key = jax.random.PRNGKey(0)
    ks = jax.random.split(key, 6)
    n = lambda k, s, sc=0.05: sc * jax.random.normal(k, s, jnp.float32)

    # nn.Linear weights (out_features, in_features) + biases
    w_attn = n(ks[0], (QKV, C_EMB))            # c_attn
    b_attn = n(ks[1], (QKV,), 0.02)
    w_proj = n(ks[2], (C_EMB, C_EMB))          # c_proj
    b_proj = n(ks[3], (C_EMB,), 0.02)
    x = jax.random.normal(ks[4], (B_SZ, T_SEQ, C_EMB), jnp.float32)

    # RoPE frequency tables (theta = 1e4) over head_size, interleaved-pair layout
    inv_freq = 10000.0 ** (-jnp.arange(0, HS, 2, dtype=jnp.float32) / HS)    # (HS/2,)
    ang = jnp.arange(T_SEQ, dtype=jnp.float32)[:, None] * inv_freq[None, :]  # (T, HS/2)
    cos2, sin2 = jnp.cos(ang), jnp.sin(ang)

    y, (k_cache, v_cache) = gqa_forward(x, w_attn, b_attn, w_proj, b_proj, cos2, sin2)
    y = jax.block_until_ready(y)
    jax.block_until_ready(k_cache)
    jax.block_until_ready(v_cache)

    # correctness check against a pure-JAX (f32) port of the torch forward
    y_ref, (k_ref, v_ref) = gqa_reference(x, w_attn, b_attn, w_proj, b_proj, cos2, sin2)
    assert jnp.allclose(y, y_ref, rtol=3e-2, atol=3e-2), \
        f"y max abs err {jnp.max(jnp.abs(y - y_ref))}"
    assert jnp.allclose(k_cache, k_ref, rtol=3e-2, atol=3e-2), \
        f"k max abs err {jnp.max(jnp.abs(k_cache - k_ref))}"
    assert jnp.allclose(v_cache, v_ref, rtol=3e-2, atol=3e-2), \
        f"v max abs err {jnp.max(jnp.abs(v_cache - v_ref))}"

    print("KERNEL_OK")
</pallas_src>

<mosaic_0001>
module attributes {stable_mosaic.version = 11 : i64} {
  func.func @gqa_kernel(%arg0: i32, %arg1: memref<1x16x128xbf16, #tpu.memory_space<vmem>>, %arg2: memref<128x256xbf16, #tpu.memory_space<vmem>>, %arg3: memref<1x256xf32, #tpu.memory_space<vmem>>, %arg4: memref<128x128xbf16, #tpu.memory_space<vmem>>, %arg5: memref<1x128xf32, #tpu.memory_space<vmem>>, %arg6: memref<16x128xf32, #tpu.memory_space<vmem>>, %arg7: memref<16x128xf32, #tpu.memory_space<vmem>>, %arg8: memref<16x64xf32, #tpu.memory_space<vmem>>, %arg9: memref<16x64xf32, #tpu.memory_space<vmem>>, %arg10: memref<128x128xbf16, #tpu.memory_space<vmem>>, %arg11: memref<64x64xbf16, #tpu.memory_space<vmem>>, %arg12: memref<16x16xf32, #tpu.memory_space<vmem>>, %arg13: memref<1x16x128xbf16, #tpu.memory_space<vmem>>, %arg14: memref<1x16x128xbf16, #tpu.memory_space<vmem>>) attributes {dimension_semantics = [#tpu.dimension_semantics<parallel>], iteration_bounds = array<i64: 2>, scalar_prefetch = 0 : i64, scratch_operands = 0 : i64, tpu.core_type = #tpu.core_type<tc>, window_params = [{transform_indices = @transform_0, window_bounds = array<i64: 1, 16, 128>}, {pipeline_mode = #tpu.pipeline_mode<synchronous>, transform_indices = @transform_1, window_bounds = array<i64: 128, 256>}, {pipeline_mode = #tpu.pipeline_mode<synchronous>, transform_indices = @transform_2, window_bounds = array<i64: 1, 256>}, {pipeline_mode = #tpu.pipeline_mode<synchronous>, transform_indices = @transform_3, window_bounds = array<i64: 128, 128>}, {pipeline_mode = #tpu.pipeline_mode<synchronous>, transform_indices = @transform_4, window_bounds = array<i64: 1, 128>}, {pipeline_mode = #tpu.pipeline_mode<synchronous>, transform_indices = @transform_5, window_bounds = array<i64: 16, 128>}, {pipeline_mode = #tpu.pipeline_mode<synchronous>, transform_indices = @transform_6, window_bounds = array<i64: 16, 128>}, {pipeline_mode = #tpu.pipeline_mode<synchronous>, transform_indices = @transform_7, window_bounds = array<i64: 16, 64>}, {pipeline_mode = #tpu.pipeline_mode<synchronous>, transform_indices = @transform_8, window_bounds = array<i64: 16, 64>}, {pipeline_mode = #tpu.pipeline_mode<synchronous>, transform_indices = @transform_9, window_bounds = array<i64: 128, 128>}, {pipeline_mode = #tpu.pipeline_mode<synchronous>, transform_indices = @transform_10, window_bounds = array<i64: 64, 64>}, {pipeline_mode = #tpu.pipeline_mode<synchronous>, transform_indices = @transform_11, window_bounds = array<i64: 16, 16>}, {transform_indices = @transform_12, window_bounds = array<i64: 1, 16, 128>}, {transform_indices = @transform_13, window_bounds = array<i64: 1, 16, 128>}]} {
    %c0 = arith.constant 0 : index
    %c0_0 = arith.constant 0 : index
    %c0_1 = arith.constant 0 : index
    %0 = vector.load %arg1[%c0, %c0_0, %c0_1] : memref<1x16x128xbf16, #tpu.memory_space<vmem>>, vector<1x16x128xbf16>
    %1 = vector.shape_cast %0 : vector<1x16x128xbf16> to vector<16x128xbf16>
    %c0_2 = arith.constant 0 : index
    %c0_3 = arith.constant 0 : index
    %2 = vector.load %arg2[%c0_2, %c0_3] : memref<128x256xbf16, #tpu.memory_space<vmem>>, vector<128x256xbf16>
    %cst = arith.constant dense<0.000000e+00> : vector<16x256xf32>
    %3 = tpu.matmul %1, %2, %cst {dimension_numbers = #tpu.dot_dimension_numbers<[1], [0], [0], [1], [0, 0, 1, 1], [], []>} : vector<16x128xbf16>, vector<128x256xbf16>, vector<16x256xf32> -> vector<16x256xf32>
    %c0_4 = arith.constant 0 : index
    %c0_5 = arith.constant 0 : index
    %4 = vector.load %arg3[%c0_4, %c0_5] : memref<1x256xf32, #tpu.memory_space<vmem>>, vector<1x256xf32>
    %5 = vector.broadcast %4 : vector<1x256xf32> to vector<16x256xf32>
    %6 = arith.addf %3, %5 : vector<16x256xf32>
    %7 = vector.extract_strided_slice %6 {offsets = [0, 0], sizes = [16, 128], strides = [1, 1]} : vector<16x256xf32> to vector<16x128xf32>
    %8 = vector.extract_strided_slice %6 {offsets = [0, 128], sizes = [16, 64], strides = [1, 1]} : vector<16x256xf32> to vector<16x64xf32>
    %9 = vector.extract_strided_slice %6 {offsets = [0, 192], sizes = [16, 64], strides = [1, 1]} : vector<16x256xf32> to vector<16x64xf32>
    %c0_6 = arith.constant 0 : index
    %c0_7 = arith.constant 0 : index
    %10 = vector.load %arg6[%c0_6, %c0_7] : memref<16x128xf32, #tpu.memory_space<vmem>>, vector<16x128xf32>
    %11 = arith.mulf %7, %10 : vector<16x128xf32>
    %12 = arith.truncf %7 : vector<16x128xf32> to vector<16x128xbf16>
    %c0_8 = arith.constant 0 : index
    %c0_9 = arith.constant 0 : index
    %13 = vector.load %arg10[%c0_8, %c0_9] : memref<128x128xbf16, #tpu.memory_space<vmem>>, vector<128x128xbf16>
    %cst_10 = arith.constant dense<0.000000e+00> : vector<16x128xf32>
    %14 = tpu.matmul %12, %13, %cst_10 {dimension_numbers = #tpu.dot_dimension_numbers<[1], [0], [0], [1], [0, 0, 1, 1], [], []>} : vector<16x128xbf16>, vector<128x128xbf16>, vector<16x128xf32> -> vector<16x128xf32>
    %c0_11 = arith.constant 0 : index
    %c0_12 = arith.constant 0 : index
    %15 = vector.load %arg7[%c0_11, %c0_12] : memref<16x128xf32, #tpu.memory_space<vmem>>, vector<16x128xf32>
    %16 = arith.mulf %14, %15 : vector<16x128xf32>
    %17 = arith.addf %11, %16 : vector<16x128xf32>
    %c0_13 = arith.constant 0 : index
    %c0_14 = arith.constant 0 : index
    %18 = vector.load %arg8[%c0_13, %c0_14] : memref<16x64xf32, #tpu.memory_space<vmem>>, vector<16x64xf32>
    %19 = arith.mulf %8, %18 : vector<16x64xf32>
    %20 = arith.truncf %8 : vector<16x64xf32> to vector<16x64xbf16>
    %c0_15 = arith.constant 0 : index
    %c0_16 = arith.constant 0 : index
    %21 = vector.load %arg11[%c0_15, %c0_16] : memref<64x64xbf16, #tpu.memory_space<vmem>>, vector<64x64xbf16>
    %cst_17 = arith.constant dense<0.000000e+00> : vector<16x64xf32>
    %22 = tpu.matmul %20, %21, %cst_17 {dimension_numbers = #tpu.dot_dimension_numbers<[1], [0], [0], [1], [0, 0, 1, 1], [], []>} : vector<16x64xbf16>, vector<64x64xbf16>, vector<16x64xf32> -> vector<16x64xf32>
    %c0_18 = arith.constant 0 : index
    %c0_19 = arith.constant 0 : index
    %23 = vector.load %arg9[%c0_18, %c0_19] : memref<16x64xf32, #tpu.memory_space<vmem>>, vector<16x64xf32>
    %24 = arith.mulf %22, %23 : vector<16x64xf32>
    %25 = arith.addf %19, %24 : vector<16x64xf32>
    %26 = arith.truncf %17 : vector<16x128xf32> to vector<16x128xbf16>
    %27 = arith.truncf %25 : vector<16x64xf32> to vector<16x64xbf16>
    %28 = arith.truncf %9 : vector<16x64xf32> to vector<16x64xbf16>
    %29 = tpu.concatenate %27, %28 in 1 : vector<16x64xbf16>, vector<16x64xbf16> -> vector<16x128xbf16>
    %c0_20 = arith.constant 0 : index
    %c0_21 = arith.constant 0 : index
    %c0_22 = arith.constant 0 : index
    %30 = vector.load %arg14[%c0_20, %c0_21, %c0_22] : memref<1x16x128xbf16, #tpu.memory_space<vmem>>, vector<1x16x128xbf16>
    %31 = vector.shape_cast %30 : vector<1x16x128xbf16> to vector<16x128xbf16>
    %32 = vector.shape_cast %29 : vector<16x128xbf16> to vector<1x16x128xbf16>
    tpu.vector_store %arg14[%c0_20, %c0_21, %c0_22], %32 {strides = array<i32>} : memref<1x16x128xbf16, #tpu.memory_space<vmem>>, vector<1x16x128xbf16>,
    %33 = vector.extract_strided_slice %26 {offsets = [0, 0], sizes = [16, 32], strides = [1, 1]} : vector<16x128xbf16> to vector<16x32xbf16>
    %34 = vector.extract_strided_slice %26 {offsets = [0, 32], sizes = [16, 32], strides = [1, 1]} : vector<16x128xbf16> to vector<16x32xbf16>
    %35 = vector.extract_strided_slice %26 {offsets = [0, 64], sizes = [16, 32], strides = [1, 1]} : vector<16x128xbf16> to vector<16x32xbf16>
    %36 = vector.extract_strided_slice %26 {offsets = [0, 96], sizes = [16, 32], strides = [1, 1]} : vector<16x128xbf16> to vector<16x32xbf16>
    %37 = vector.shape_cast %33 : vector<16x32xbf16> to vector<1x16x32xbf16>
    %38 = vector.shape_cast %34 : vector<16x32xbf16> to vector<1x16x32xbf16>
    %39 = vector.shape_cast %35 : vector<16x32xbf16> to vector<1x16x32xbf16>
    %40 = vector.shape_cast %36 : vector<16x32xbf16> to vector<1x16x32xbf16>
    %41 = tpu.concatenate %37, %38, %39, %40 in 0 : vector<1x16x32xbf16>, vector<1x16x32xbf16>, vector<1x16x32xbf16>, vector<1x16x32xbf16> -> vector<4x16x32xbf16>
    %42 = vector.extract_strided_slice %27 {offsets = [0, 0], sizes = [16, 32], strides = [1, 1]} : vector<16x64xbf16> to vector<16x32xbf16>
    %43 = vector.extract_strided_slice %27 {offsets = [0, 0], sizes = [16, 32], strides = [1, 1]} : vector<16x64xbf16> to vector<16x32xbf16>
    %44 = vector.extract_strided_slice %27 {offsets = [0, 32], sizes = [16, 32], strides = [1, 1]} : vector<16x64xbf16> to vector<16x32xbf16>
    %45 = vector.extract_strided_slice %27 {offsets = [0, 32], sizes = [16, 32], strides = [1, 1]} : vector<16x64xbf16> to vector<16x32xbf16>
    %46 = vector.shape_cast %42 : vector<16x32xbf16> to vector<1x16x32xbf16>
    %47 = vector.shape_cast %43 : vector<16x32xbf16> to vector<1x16x32xbf16>
    %48 = vector.shape_cast %44 : vector<16x32xbf16> to vector<1x16x32xbf16>
    %49 = vector.shape_cast %45 : vector<16x32xbf16> to vector<1x16x32xbf16>
    %50 = tpu.concatenate %46, %47, %48, %49 in 0 : vector<1x16x32xbf16>, vector<1x16x32xbf16>, vector<1x16x32xbf16>, vector<1x16x32xbf16> -> vector<4x16x32xbf16>
    %51 = vector.extract_strided_slice %28 {offsets = [0, 0], sizes = [16, 32], strides = [1, 1]} : vector<16x64xbf16> to vector<16x32xbf16>
    %52 = vector.extract_strided_slice %28 {offsets = [0, 0], sizes = [16, 32], strides = [1, 1]} : vector<16x64xbf16> to vector<16x32xbf16>
    %53 = vector.extract_strided_slice %28 {offsets = [0, 32], sizes = [16, 32], strides = [1, 1]} : vector<16x64xbf16> to vector<16x32xbf16>
    %54 = vector.extract_strided_slice %28 {offsets = [0, 32], sizes = [16, 32], strides = [1, 1]} : vector<16x64xbf16> to vector<16x32xbf16>
    %55 = vector.shape_cast %51 : vector<16x32xbf16> to vector<1x16x32xbf16>
    %56 = vector.shape_cast %52 : vector<16x32xbf16> to vector<1x16x32xbf16>
    %57 = vector.shape_cast %53 : vector<16x32xbf16> to vector<1x16x32xbf16>
    %58 = vector.shape_cast %54 : vector<16x32xbf16> to vector<1x16x32xbf16>
    %59 = tpu.concatenate %55, %56, %57, %58 in 0 : vector<1x16x32xbf16>, vector<1x16x32xbf16>, vector<1x16x32xbf16>, vector<1x16x32xbf16> -> vector<4x16x32xbf16>
    "tpu.trace_start"() <{level = 10 : i32, message = "hqd,hkd->hqk"}> : () -> ()
    %cst_23 = arith.constant dense<0.000000e+00> : vector<4x16x16xf32>
    %60 = tpu.matmul %41, %50, %cst_23 {dimension_numbers = #tpu.dot_dimension_numbers<[2], [2], [1], [1], [0, 0, 0, 1, 1, 1], [0], [0]>} : vector<4x16x32xbf16>, vector<4x16x32xbf16>, vector<4x16x16xf32> -> vector<4x16x16xf32>
    "tpu.trace_stop"() : () -> ()
    %c0_24 = arith.constant 0 : index
    %c0_25 = arith.constant 0 : index
    %61 = vector.load %arg12[%c0_24, %c0_25] : memref<16x16xf32, #tpu.memory_space<vmem>>, vector<16x16xf32>
    %62 = vector.shape_cast %61 : vector<16x16xf32> to vector<1x16x16xf32>
    %63 = vector.broadcast %62 : vector<1x16x16xf32> to vector<4x16x16xf32>
    %64 = arith.addf %60, %63 : vector<4x16x16xf32>
    %cst_26 = arith.constant dense<0xFF800000> : vector<4x16xf32>
    %65 = vector.multi_reduction <maximumf>, %64, %cst_26 [2] : vector<4x16x16xf32> to vector<4x16xf32>
    %66 = vector.shape_cast %65 : vector<4x16xf32> to vector<4x16x1xf32>
    %67 = vector.broadcast %66 : vector<4x16x1xf32> to vector<4x16x16xf32>
    %68 = arith.subf %64, %67 : vector<4x16x16xf32>
    %69 = math.exp %68 : vector<4x16x16xf32>
    %cst_27 = arith.constant dense<0.000000e+00> : vector<4x16xf32>
    %70 = vector.multi_reduction <add>, %69, %cst_27 [2] : vector<4x16x16xf32> to vector<4x16xf32>
    %71 = vector.shape_cast %70 : vector<4x16xf32> to vector<4x16x1xf32>
    %72 = tpu.reciprocal %71 {approx = true} : vector<4x16x1xf32> -> vector<4x16x1xf32>
    %73 = vector.broadcast %72 : vector<4x16x1xf32> to vector<4x16x16xf32>
    %74 = arith.mulf %69, %73 : vector<4x16x16xf32>
    %75 = arith.truncf %74 : vector<4x16x16xf32> to vector<4x16x16xbf16>
    "tpu.trace_start"() <{level = 10 : i32, message = "hqk,hkd->hqd"}> : () -> ()
    %cst_28 = arith.constant dense<0.000000e+00> : vector<4x16x32xf32>
    %76 = tpu.matmul %75, %59, %cst_28 {dimension_numbers = #tpu.dot_dimension_numbers<[2], [1], [1], [2], [0, 0, 0, 1, 1, 2], [0], [0]>} : vector<4x16x16xbf16>, vector<4x16x32xbf16>, vector<4x16x32xf32> -> vector<4x16x32xf32>
    "tpu.trace_stop"() : () -> ()
    %77 = vector.extract_strided_slice %76 {offsets = [0, 0, 0], sizes = [1, 16, 32], strides = [1, 1, 1]} : vector<4x16x32xf32> to vector<1x16x32xf32>
    %78 = vector.shape_cast %77 : vector<1x16x32xf32> to vector<16x32xf32>
    %79 = vector.extract_strided_slice %76 {offsets = [1, 0, 0], sizes = [1, 16, 32], strides = [1, 1, 1]} : vector<4x16x32xf32> to vector<1x16x32xf32>
    %80 = vector.shape_cast %79 : vector<1x16x32xf32> to vector<16x32xf32>
    %81 = vector.extract_strided_slice %76 {offsets = [2, 0, 0], sizes = [1, 16, 32], strides = [1, 1, 1]} : vector<4x16x32xf32> to vector<1x16x32xf32>
    %82 = vector.shape_cast %81 : vector<1x16x32xf32> to vector<16x32xf32>
    %83 = vector.extract_strided_slice %76 {offsets = [3, 0, 0], sizes = [1, 16, 32], strides = [1, 1, 1]} : vector<4x16x32xf32> to vector<1x16x32xf32>
    %84 = vector.shape_cast %83 : vector<1x16x32xf32> to vector<16x32xf32>
    %85 = tpu.concatenate %78, %80, %82, %84 in 1 : vector<16x32xf32>, vector<16x32xf32>, vector<16x32xf32>, vector<16x32xf32> -> vector<16x128xf32>
    %86 = arith.truncf %85 : vector<16x128xf32> to vector<16x128xbf16>
    %c0_29 = arith.constant 0 : index
    %c0_30 = arith.constant 0 : index
    %87 = vector.load %arg4[%c0_29, %c0_30] : memref<128x128xbf16, #tpu.memory_space<vmem>>, vector<128x128xbf16>
    %cst_31 = arith.constant dense<0.000000e+00> : vector<16x128xf32>
    %88 = tpu.matmul %86, %87, %cst_31 {dimension_numbers = #tpu.dot_dimension_numbers<[1], [0], [0], [1], [0, 0, 1, 1], [], []>} : vector<16x128xbf16>, vector<128x128xbf16>, vector<16x128xf32> -> vector<16x128xf32>
    %c0_32 = arith.constant 0 : index
    %c0_33 = arith.constant 0 : index
    %89 = vector.load %arg5[%c0_32, %c0_33] : memref<1x128xf32, #tpu.memory_space<vmem>>, vector<1x128xf32>
    %90 = vector.broadcast %89 : vector<1x128xf32> to vector<16x128xf32>
    %91 = arith.addf %88, %90 : vector<16x128xf32>
    %92 = arith.truncf %91 : vector<16x128xf32> to vector<16x128xbf16>
    %c0_34 = arith.constant 0 : index
    %c0_35 = arith.constant 0 : index
    %c0_36 = arith.constant 0 : index
    %93 = vector.load %arg13[%c0_34, %c0_35, %c0_36] : memref<1x16x128xbf16, #tpu.memory_space<vmem>>, vector<1x16x128xbf16>
    %94 = vector.shape_cast %93 : vector<1x16x128xbf16> to vector<16x128xbf16>
    %95 = vector.shape_cast %92 : vector<16x128xbf16> to vector<1x16x128xbf16>
    tpu.vector_store %arg13[%c0_34, %c0_35, %c0_36], %95 {strides = array<i32>} : memref<1x16x128xbf16, #tpu.memory_space<vmem>>, vector<1x16x128xbf16>,
    return
  }
  func.func @transform_0(%arg0: i32) -> (i32, i32, i32) {
    %c0_i32 = arith.constant 0 : i32
    %c0_i32_0 = arith.constant 0 : i32
    %c0_i32_1 = arith.constant 0 : i32
    return %arg0, %c0_i32, %c0_i32_0 : i32, i32, i32
  }
  func.func @transform_1(%arg0: i32) -> (i32, i32) {
    %c0_i32 = arith.constant 0 : i32
    %c0_i32_0 = arith.constant 0 : i32
    %c0_i32_1 = arith.constant 0 : i32
    return %c0_i32, %c0_i32_0 : i32, i32
  }
  func.func @transform_2(%arg0: i32) -> (i32, i32) {
    %c0_i32 = arith.constant 0 : i32
    %c0_i32_0 = arith.constant 0 : i32
    %c0_i32_1 = arith.constant 0 : i32
    return %c0_i32, %c0_i32_0 : i32, i32
  }
  func.func @transform_3(%arg0: i32) -> (i32, i32) {
    %c0_i32 = arith.constant 0 : i32
    %c0_i32_0 = arith.constant 0 : i32
    %c0_i32_1 = arith.constant 0 : i32
    return %c0_i32, %c0_i32_0 : i32, i32
  }
  func.func @transform_4(%arg0: i32) -> (i32, i32) {
    %c0_i32 = arith.constant 0 : i32
    %c0_i32_0 = arith.constant 0 : i32
    %c0_i32_1 = arith.constant 0 : i32
    return %c0_i32, %c0_i32_0 : i32, i32
  }
  func.func @transform_5(%arg0: i32) -> (i32, i32) {
    %c0_i32 = arith.constant 0 : i32
    %c0_i32_0 = arith.constant 0 : i32
    %c0_i32_1 = arith.constant 0 : i32
    return %c0_i32, %c0_i32_0 : i32, i32
  }
  func.func @transform_6(%arg0: i32) -> (i32, i32) {
    %c0_i32 = arith.constant 0 : i32
    %c0_i32_0 = arith.constant 0 : i32
    %c0_i32_1 = arith.constant 0 : i32
    return %c0_i32, %c0_i32_0 : i32, i32
  }
  func.func @transform_7(%arg0: i32) -> (i32, i32) {
    %c0_i32 = arith.constant 0 : i32
    %c0_i32_0 = arith.constant 0 : i32
    %c0_i32_1 = arith.constant 0 : i32
    return %c0_i32, %c0_i32_0 : i32, i32
  }
  func.func @transform_8(%arg0: i32) -> (i32, i32) {
    %c0_i32 = arith.constant 0 : i32
    %c0_i32_0 = arith.constant 0 : i32
    %c0_i32_1 = arith.constant 0 : i32
    return %c0_i32, %c0_i32_0 : i32, i32
  }
  func.func @transform_9(%arg0: i32) -> (i32, i32) {
    %c0_i32 = arith.constant 0 : i32
    %c0_i32_0 = arith.constant 0 : i32
    %c0_i32_1 = arith.constant 0 : i32
    return %c0_i32, %c0_i32_0 : i32, i32
  }
  func.func @transform_10(%arg0: i32) -> (i32, i32) {
    %c0_i32 = arith.constant 0 : i32
    %c0_i32_0 = arith.constant 0 : i32
    %c0_i32_1 = arith.constant 0 : i32
    return %c0_i32, %c0_i32_0 : i32, i32
  }
  func.func @transform_11(%arg0: i32) -> (i32, i32) {
    %c0_i32 = arith.constant 0 : i32
    %c0_i32_0 = arith.constant 0 : i32
    %c0_i32_1 = arith.constant 0 : i32
    return %c0_i32, %c0_i32_0 : i32, i32
  }
  func.func @transform_12(%arg0: i32) -> (i32, i32, i32) {
    %c0_i32 = arith.constant 0 : i32
    %c0_i32_0 = arith.constant 0 : i32
    %c0_i32_1 = arith.constant 0 : i32
    return %arg0, %c0_i32, %c0_i32_0 : i32, i32, i32
  }
  func.func @transform_13(%arg0: i32) -> (i32, i32, i32) {
    %c0_i32 = arith.constant 0 : i32
    %c0_i32_0 = arith.constant 0 : i32
    %c0_i32_1 = arith.constant 0 : i32
    return %arg0, %c0_i32, %c0_i32_0 : i32, i32, i32
  }
}

</mosaic_0001>

<llo_original>
// kernel: tpu_custom_call.1
$region0: #{tpu_custom_call.1}
  #allocation0 [shape = 'u32[]', space=smem, size = 0x4, offset = 0x4, fixed_abs, tag = 'smem constant byte address 0x4 - core index']
  #allocation1 [shape = 'u32[144,128]{1,0:T(1,128)}', space=vmem, size = 0x12000, scoped, tag = 'internal scratch']
  %s0 = inlined_call_operand.hbm [shape: bf16[2,16,128], index: 0, kind: input, shape index: {}]
  %s1 = inlined_call_operand.hbm [shape: bf16[128,256], index: 1, kind: input, shape index: {}]
  %s2 = inlined_call_operand.vmem [shape: f32[1,256], index: 2, kind: input, shape index: {}]
  %s3 = inlined_call_operand.hbm [shape: bf16[128,128], index: 3, kind: input, shape index: {}]
  %s4 = inlined_call_operand.vmem [shape: f32[1,128], index: 4, kind: input, shape index: {}]
  %s5 = inlined_call_operand.hbm [shape: f32[16,128], index: 5, kind: input, shape index: {}]
  %s6 = inlined_call_operand.hbm [shape: f32[16,128], index: 6, kind: input, shape index: {}]
  %s7 = inlined_call_operand.hbm [shape: f32[16,64], index: 7, kind: input, shape index: {}]
  %s8 = inlined_call_operand.hbm [shape: f32[16,64], index: 8, kind: input, shape index: {}]
  %s9 = inlined_call_operand.hbm [shape: bf16[128,128], index: 9, kind: input, shape index: {}]
  %s10 = inlined_call_operand.vmem [shape: bf16[64,64], index: 10, kind: input, shape index: {}]
  %s11 = inlined_call_operand.hbm [shape: f32[16,16], index: 11, kind: input, shape index: {}]
  %s12 = inlined_call_operand.hbm [shape: bf16[2,16,128], index: 12, kind: output, shape index: {0}]
  %s13 = inlined_call_operand.hbm [shape: bf16[2,16,128], index: 13, kind: output, shape index: {1}]
  %14 = xla_tuple %s12, %s13
  %s15 = sld [smem:[#allocation0]]
  $region125: #{tpu_custom_call.1} parent=0
    _
  %s17 = ssub.s32 1, %s15
  %s18 = scalar_select 0, %s17, %s15
  $region1: #{tpu_custom_call.1} parent=0
    #allocation2 [shape = 'u8[8192]{0}', space=vmem, size = 0x2000, scoped, tag = 'input window, operand 0']
    #allocation3 [shape = 's32[2]{0}', space=sflag, size = 0x8, scoped, tag = 'scoped memory for tpu_custom_call.1']
    #allocation4 [shape = 's32[2]{0}', space=sflag, size = 0x8, scoped, tag = 'scoped memory for tpu_custom_call.1']
    #allocation5 [shape = 'u8[65536]{0}', space=vmem, size = 0x10000, scoped, tag = 'input window, operand 1, single buffered']
    #allocation6 [shape = 's32[1]{0}', space=sflag, size = 0x4, scoped, tag = 'scoped memory for tpu_custom_call.1']
    #allocation7 [shape = 'u8[32768]{0}', space=vmem, size = 0x8000, scoped, tag = 'input window, operand 3, single buffered']
    #allocation8 [shape = 'u8[8192]{0}', space=vmem, size = 0x2000, scoped, tag = 'input window, operand 5, single buffered']
    #allocation9 [shape = 's32[1]{0}', space=sflag, size = 0x4, scoped, tag = 'scoped memory for tpu_custom_call.1']
    #allocation10 [shape = 'u8[8192]{0}', space=vmem, size = 0x2000, scoped, tag = 'input window, operand 6, single buffered']
    #allocation11 [shape = 'u8[8192]{0}', space=vmem, size = 0x2000, scoped, tag = 'input window, operand 7, single buffered']
    #allocation12 [shape = 's32[1]{0}', space=sflag, size = 0x4, scoped, tag = 'scoped memory for tpu_custom_call.1']
    #allocation13 [shape = 'u8[8192]{0}', space=vmem, size = 0x2000, scoped, tag = 'input window, operand 8, single buffered']
    #allocation14 [shape = 'u8[32768]{0}', space=vmem, size = 0x8000, scoped, tag = 'input window, operand 9, single buffered']
    #allocation15 [shape = 's32[1]{0}', space=sflag, size = 0x4, scoped, tag = 'scoped memory for tpu_custom_call.1']
    #allocation16 [shape = 'u8[8192]{0}', space=vmem, size = 0x2000, scoped, tag = 'input window, operand 11, single buffered']
    #allocation17 [shape = 'u8[8192]{0}', space=vmem, size = 0x2000, scoped, tag = 'output window, operand 0']
    #allocation18 [shape = 'u8[8192]{0}', space=vmem, size = 0x2000, scoped, tag = 'output window, operand 1']
    #allocation19 [shape = 's32[2]{0}', space=sflag, size = 0x8, scoped, tag = 'scoped memory for tpu_custom_call.1']
    %19 = vsyncpa [#allocation3], 0
    %s20 = scalar_lea.sflag [#allocation3], 1
    %21 = vsyncpa %s20, 0
    %22 = vsyncpa [#allocation6], 0
    %23 = vsyncpa [#allocation9], 0
    %24 = vsyncpa [#allocation12], 0
    %25 = vsyncpa [#allocation15], 0
    %26 = vsyncpa [#allocation4], 0
    %s27 = scalar_lea.sflag [#allocation4], 1
    %28 = vsyncpa %s27, 0
    %29 = vsyncpa [#allocation19], 0
    %s30 = scalar_lea.sflag [#allocation19], 1
    %31 = vsyncpa %s30, 0
    loop: start=0, step=1, limit=4
    $region2: #{tpu_custom_call.1} parent=1 // loop_pre_header
      _
    $region3: #{tpu_custom_call.1} parent=1 // loop_header
      %s33 = sphi 0, %s37
      %p34 = scmp.ge.s32.totalorder %s33, 4
      %s43 = sphi 0, %s45
      %s46 = sphi 0, %s43
      %s47 = sphi 0, %s46
      %s63 = sphi 0, %s47
      %s67 = sphi 0, %s67
      %s69 = sphi 0, %s67
      %s70 = sphi 0, %s69
      %s84 = sphi 0, %s70
      %s88 = sphi 0, %s88
      %s90 = sphi 0, %s88
      %s91 = sphi 0, %s90
      %s105 = sphi 0, %s91
      %s109 = sphi 0, %s109
      %s111 = sphi 0, %s109
      %s112 = sphi 0, %s111
      %s126 = sphi 0, %s112
      %s130 = sphi 0, %s130
      %s132 = sphi 0, %s130
      %s133 = sphi 0, %s132
      %s147 = sphi 0, %s133
      %s151 = sphi 0, %s151
      %s153 = sphi 0, %s151
      %s154 = sphi 0, %s153
      %s168 = sphi 0, %s154
      %s172 = sphi 0, %s172
      %s174 = sphi 0, %s172
      %s175 = sphi 0, %s174
      %s189 = sphi 0, %s175
      %s193 = sphi 0, %s193
      %s195 = sphi 0, %s193
      %s196 = sphi 0, %s195
      %s210 = sphi 0, %s196
      %s214 = sphi 0, %s214
      %s216 = sphi 0, %s214
      %s217 = sphi 0, %s216
      %s231 = sphi 0, %s217
      %s235 = sphi 0, %s235
      %s237 = sphi 0, %s235
      %s238 = sphi 0, %s237
      %s252 = sphi 0, %s238
      %s256 = sphi 0, %s256
      %s258 = sphi 0, %s256
      %s259 = sphi 0, %s258
      %s273 = sphi 0, %s259
      %s277 = sphi 0, %s277
      %s279 = sphi 0, %s277
      %s280 = sphi 0, %s279
      %s294 = sphi 0, %s280
      %s300 = sphi 0, %s302
      %s303 = sphi 0, %s300
      %s304 = sphi 0, %s303
      %s320 = sphi 0, %s304
      %s326 = sphi 0, %s328
      %s329 = sphi 0, %s326
      %s330 = sphi 0, %s329
      %s346 = sphi 0, %s330
    $region4: #{tpu_custom_call.1} parent=1 // loop_header_branch
      %36 = sbr.rel (%p34) target = $region8
    $region5: #{tpu_custom_call.1} parent=1 // loop_body
      %s38 = ssub.s32 %s33, 1
      %s39 = ssub.s32 %s33, 2
      %s40 = sadd.s32 %s33, 1
      %s41 = ssub.s32 %s33, %s40
      %p42 = scmp.eq.s32.totalorder %s41, 0
      %s44 = sadd.s32 %s43, 1
      %s45 = scalar_select %p42, %s43, %s44
      %p48 = pneg %p42
      %p49 = scmp.eq.s32.totalorder %s33, 1
      %p50 = por %p48, %p49
      %p51 = scmp.ne.s32.totalorder %s43, %s46
      %p52 = scmp.eq.s32.totalorder %s33, 0
      %p53 = por %p51, %p52
      %p54 = scmp.ne.s32.totalorder %s43, %s46
      %p55 = scmp.eq.s32.totalorder %s38, 1
      %p56 = por %p54, %p55
      %p57 = scmp.ne.s32.totalorder %s46, %s47
      %p58 = scmp.eq.s32.totalorder %s38, 0
      %p59 = por %p57, %p58
      %p60 = scmp.ne.s32.totalorder %s46, %s47
      %p61 = scmp.eq.s32.totalorder %s39, 1
      %p62 = por %p60, %p61
      %p64 = scmp.ne.s32.totalorder %s47, %s63
      %p65 = scmp.eq.s32.totalorder %s39, 0
      %p66 = por %p64, %p65
      %s68 = sadd.s32 %s67, 1
      %p71 = scmp.eq.s32.totalorder %s33, 1
      %p72 = scmp.ne.s32.totalorder %s67, %s69
      %p73 = scmp.eq.s32.totalorder %s33, 0
      %p74 = por %p72, %p73
      %p75 = scmp.ne.s32.totalorder %s67, %s69
      %p76 = scmp.eq.s32.totalorder %s38, 1
      %p77 = por %p75, %p76
      %p78 = scmp.ne.s32.totalorder %s69, %s70
      %p79 = scmp.eq.s32.totalorder %s38, 0
      %p80 = por %p78, %p79
      %p81 = scmp.ne.s32.totalorder %s69, %s70
      %p82 = scmp.eq.s32.totalorder %s39, 1
      %p83 = por %p81, %p82
      %p85 = scmp.ne.s32.totalorder %s70, %s84
      %p86 = scmp.eq.s32.totalorder %s39, 0
      %p87 = por %p85, %p86
      %s89 = sadd.s32 %s88, 1
      %p92 = scmp.eq.s32.totalorder %s33, 1
      %p93 = scmp.ne.s32.totalorder %s88, %s90
      %p94 = scmp.eq.s32.totalorder %s33, 0
      %p95 = por %p93, %p94
      %p96 = scmp.ne.s32.totalorder %s88, %s90
      %p97 = scmp.eq.s32.totalorder %s38, 1
      %p98 = por %p96, %p97
      %p99 = scmp.ne.s32.totalorder %s90, %s91
      %p100 = scmp.eq.s32.totalorder %s38, 0
      %p101 = por %p99, %p100
      %p102 = scmp.ne.s32.totalorder %s90, %s91
      %p103 = scmp.eq.s32.totalorder %s39, 1
      %p104 = por %p102, %p103
      %p106 = scmp.ne.s32.totalorder %s91, %s105
      %p107 = scmp.eq.s32.totalorder %s39, 0
      %p108 = por %p106, %p107
      %s110 = sadd.s32 %s109, 1
      %p113 = scmp.eq.s32.totalorder %s33, 1
      %p114 = scmp.ne.s32.totalorder %s109, %s111
      %p115 = scmp.eq.s32.totalorder %s33, 0
      %p116 = por %p114, %p115
      %p117 = scmp.ne.s32.totalorder %s109, %s111
      %p118 = scmp.eq.s32.totalorder %s38, 1
      %p119 = por %p117, %p118
      %p120 = scmp.ne.s32.totalorder %s111, %s112
      %p121 = scmp.eq.s32.totalorder %s38, 0
      %p122 = por %p120, %p121
      %p123 = scmp.ne.s32.totalorder %s111, %s112
      %p124 = scmp.eq.s32.totalorder %s39, 1
      %p125 = por %p123, %p124
      %p127 = scmp.ne.s32.totalorder %s112, %s126
      %p128 = scmp.eq.s32.totalorder %s39, 0
      %p129 = por %p127, %p128
      %s131 = sadd.s32 %s130, 1
      %p134 = scmp.eq.s32.totalorder %s33, 1
      %p135 = scmp.ne.s32.totalorder %s130, %s132
      %p136 = scmp.eq.s32.totalorder %s33, 0
      %p137 = por %p135, %p136
      %p138 = scmp.ne.s32.totalorder %s130, %s132
      %p139 = scmp.eq.s32.totalorder %s38, 1
      %p140 = por %p138, %p139
      %p141 = scmp.ne.s32.totalorder %s132, %s133
      %p142 = scmp.eq.s32.totalorder %s38, 0
      %p143 = por %p141, %p142
      %p144 = scmp.ne.s32.totalorder %s132, %s133
      %p145 = scmp.eq.s32.totalorder %s39, 1
      %p146 = por %p144, %p145
      %p148 = scmp.ne.s32.totalorder %s133, %s147
      %p149 = scmp.eq.s32.totalorder %s39, 0
      %p150 = por %p148, %p149
      %s152 = sadd.s32 %s151, 1
      %p155 = scmp.eq.s32.totalorder %s33, 1
      %p156 = scmp.ne.s32.totalorder %s151, %s153
      %p157 = scmp.eq.s32.totalorder %s33, 0
      %p158 = por %p156, %p157
      %p159 = scmp.ne.s32.totalorder %s151, %s153
      %p160 = scmp.eq.s32.totalorder %s38, 1
      %p161 = por %p159, %p160
      %p162 = scmp.ne.s32.totalorder %s153, %s154
      %p163 = scmp.eq.s32.totalorder %s38, 0
      %p164 = por %p162, %p163
      %p165 = scmp.ne.s32.totalorder %s153, %s154
      %p166 = scmp.eq.s32.totalorder %s39, 1
      %p167 = por %p165, %p166
      %p169 = scmp.ne.s32.totalorder %s154, %s168
      %p170 = scmp.eq.s32.totalorder %s39, 0
      %p171 = por %p169, %p170
      %s173 = sadd.s32 %s172, 1
      %p176 = scmp.eq.s32.totalorder %s33, 1
      %p177 = scmp.ne.s32.totalorder %s172, %s174
      %p178 = scmp.eq.s32.totalorder %s33, 0
      %p179 = por %p177, %p178
      %p180 = scmp.ne.s32.totalorder %s172, %s174
      %p181 = scmp.eq.s32.totalorder %s38, 1
      %p182 = por %p180, %p181
      %p183 = scmp.ne.s32.totalorder %s174, %s175
      %p184 = scmp.eq.s32.totalorder %s38, 0
      %p185 = por %p183, %p184
      %p186 = scmp.ne.s32.totalorder %s174, %s175
      %p187 = scmp.eq.s32.totalorder %s39, 1
      %p188 = por %p186, %p187
      %p190 = scmp.ne.s32.totalorder %s175, %s189
      %p191 = scmp.eq.s32.totalorder %s39, 0
      %p192 = por %p190, %p191
      %s194 = sadd.s32 %s193, 1
      %p197 = scmp.eq.s32.totalorder %s33, 1
      %p198 = scmp.ne.s32.totalorder %s193, %s195
      %p199 = scmp.eq.s32.totalorder %s33, 0
      %p200 = por %p198, %p199
      %p201 = scmp.ne.s32.totalorder %s193, %s195
      %p202 = scmp.eq.s32.totalorder %s38, 1
      %p203 = por %p201, %p202
      %p204 = scmp.ne.s32.totalorder %s195, %s196
      %p205 = scmp.eq.s32.totalorder %s38, 0
      %p206 = por %p204, %p205
      %p207 = scmp.ne.s32.totalorder %s195, %s196
      %p208 = scmp.eq.s32.totalorder %s39, 1
      %p209 = por %p207, %p208
      %p211 = scmp.ne.s32.totalorder %s196, %s210
      %p212 = scmp.eq.s32.totalorder %s39, 0
      %p213 = por %p211, %p212
      %s215 = sadd.s32 %s214, 1
      %p218 = scmp.eq.s32.totalorder %s33, 1
      %p219 = scmp.ne.s32.totalorder %s214, %s216
      %p220 = scmp.eq.s32.totalorder %s33, 0
      %p221 = por %p219, %p220
      %p222 = scmp.ne.s32.totalorder %s214, %s216
      %p223 = scmp.eq.s32.totalorder %s38, 1
      %p224 = por %p222, %p223
      %p225 = scmp.ne.s32.totalorder %s216, %s217
      %p226 = scmp.eq.s32.totalorder %s38, 0
      %p227 = por %p225, %p226
      %p228 = scmp.ne.s32.totalorder %s216, %s217
      %p229 = scmp.eq.s32.totalorder %s39, 1
      %p230 = por %p228, %p229
      %p232 = scmp.ne.s32.totalorder %s217, %s231
      %p233 = scmp.eq.s32.totalorder %s39, 0
      %p234 = por %p232, %p233
      %s236 = sadd.s32 %s235, 1
      %p239 = scmp.eq.s32.totalorder %s33, 1
      %p240 = scmp.ne.s32.totalorder %s235, %s237
      %p241 = scmp.eq.s32.totalorder %s33, 0
      %p242 = por %p240, %p241
      %p243 = scmp.ne.s32.totalorder %s235, %s237
      %p244 = scmp.eq.s32.totalorder %s38, 1
      %p245 = por %p243, %p244
      %p246 = scmp.ne.s32.totalorder %s237, %s238
      %p247 = scmp.eq.s32.totalorder %s38, 0
      %p248 = por %p246, %p247
      %p249 = scmp.ne.s32.totalorder %s237, %s238
      %p250 = scmp.eq.s32.totalorder %s39, 1
      %p251 = por %p249, %p250
      %p253 = scmp.ne.s32.totalorder %s238, %s252
      %p254 = scmp.eq.s32.totalorder %s39, 0
      %p255 = por %p253, %p254
      %s257 = sadd.s32 %s256, 1
      %p260 = scmp.eq.s32.totalorder %s33, 1
      %p261 = scmp.ne.s32.totalorder %s256, %s258
      %p262 = scmp.eq.s32.totalorder %s33, 0
      %p263 = por %p261, %p262
      %p264 = scmp.ne.s32.totalorder %s256, %s258
      %p265 = scmp.eq.s32.totalorder %s38, 1
      %p266 = por %p264, %p265
      %p267 = scmp.ne.s32.totalorder %s258, %s259
      %p268 = scmp.eq.s32.totalorder %s38, 0
      %p269 = por %p267, %p268
      %p270 = scmp.ne.s32.totalorder %s258, %s259
      %p271 = scmp.eq.s32.totalorder %s39, 1
      %p272 = por %p270, %p271
      %p274 = scmp.ne.s32.totalorder %s259, %s273
      %p275 = scmp.eq.s32.totalorder %s39, 0
      %p276 = por %p274, %p275
      %s278 = sadd.s32 %s277, 1
      %p281 = scmp.eq.s32.totalorder %s33, 1
      %p282 = scmp.ne.s32.totalorder %s277, %s279
      %p283 = scmp.eq.s32.totalorder %s33, 0
      %p284 = por %p282, %p283
      %p285 = scmp.ne.s32.totalorder %s277, %s279
      %p286 = scmp.eq.s32.totalorder %s38, 1
      %p287 = por %p285, %p286
      %p288 = scmp.ne.s32.totalorder %s279, %s280
      %p289 = scmp.eq.s32.totalorder %s38, 0
      %p290 = por %p288, %p289
      %p291 = scmp.ne.s32.totalorder %s279, %s280
      %p292 = scmp.eq.s32.totalorder %s39, 1
      %p293 = por %p291, %p292
      %p295 = scmp.ne.s32.totalorder %s280, %s294
      %p296 = scmp.eq.s32.totalorder %s39, 0
      %p297 = por %p295, %p296
      %s298 = ssub.s32 %s33, %s40
      %p299 = scmp.eq.s32.totalorder %s298, 0
      %s301 = sadd.s32 %s300, 1
      %s302 = scalar_select %p299, %s300, %s301
      %p305 = pneg %p299
      %p306 = scmp.eq.s32.totalorder %s33, 1
      %p307 = por %p305, %p306
      %p308 = scmp.ne.s32.totalorder %s300, %s303
      %p309 = scmp.eq.s32.totalorder %s33, 0
      %p310 = por %p308, %p309
      %p311 = scmp.ne.s32.totalorder %s300, %s303
      %p312 = scmp.eq.s32.totalorder %s38, 1
      %p313 = por %p311, %p312
      %p314 = scmp.ne.s32.totalorder %s303, %s304
      %p315 = scmp.eq.s32.totalorder %s38, 0
      %p316 = por %p314, %p315
      %p317 = scmp.ne.s32.totalorder %s303, %s304
      %p318 = scmp.eq.s32.totalorder %s39, 1
      %p319 = por %p317, %p318
      %p321 = scmp.ne.s32.totalorder %s304, %s320
      %p322 = scmp.eq.s32.totalorder %s39, 0
      %p323 = por %p321, %p322
      %s324 = ssub.s32 %s33, %s40
      %p325 = scmp.eq.s32.totalorder %s324, 0
      %s327 = sadd.s32 %s326, 1
      %s328 = scalar_select %p325, %s326, %s327
      %p331 = pneg %p325
      %p332 = scmp.eq.s32.totalorder %s33, 1
      %p333 = por %p331, %p332
      %p334 = scmp.ne.s32.totalorder %s326, %s329
      %p335 = scmp.eq.s32.totalorder %s33, 0
      %p336 = por %p334, %p335
      %p337 = scmp.ne.s32.totalorder %s326, %s329
      %p338 = scmp.eq.s32.totalorder %s38, 1
      %p339 = por %p337, %p338
      %p340 = scmp.ne.s32.totalorder %s329, %s330
      %p341 = scmp.eq.s32.totalorder %s38, 0
      %p342 = por %p340, %p341
      %p343 = scmp.ne.s32.totalorder %s329, %s330
      %p344 = scmp.eq.s32.totalorder %s39, 1
      %p345 = por %p343, %p344
      %p347 = scmp.ne.s32.totalorder %s330, %s346
      %p348 = scmp.eq.s32.totalorder %s39, 0
      %p349 = por %p347, %p348
      %p350 = scmp.le.s32.totalorder 1, %s33
      %p351 = scmp.lt.s32.totalorder %s33, 3
      %p352 = pnand %p350, %p351
      %p353 = pneg %p352
      // Predicated region
      $region9: #{tpu_custom_call.1} parent=5 // pred_check
        _
      $region10: #{tpu_custom_call.1} parent=5 // pred_check_branch
        %355 = sbr.rel (%p352) target = $region12
      $region11: #{tpu_custom_call.1} parent=5 // pred_region
        %s356 = ssub.s32 %s33, 1
        // Predicated region
        $region13: #{tpu_custom_call.1} parent=11 // pred_check
          %p357 = pneg %p80
        $region14: #{tpu_custom_call.1} parent=11 // pred_check_branch
          %359 = sbr.rel (%p357) target = $region16
        $region15: #{tpu_custom_call.1} parent=11 // pred_region
          %s361 = ssub.s32 2048, 2048
          %362 = vsyncadd [#allocation6], %s361
          %s363 = sshll.u32 [#allocation5], 4
          %s364 = int_to_ptr.vmem [resolvable:$true] %s363
          %369 = dma.hbm_to_vmem [thread:$0]  %s1, 2048, %s364, [#allocation6], 128, 128, 8
        $region16: #{tpu_custom_call.1} parent=11 // pred_fallthru
          _
        // Predicated region
        $region17: #{tpu_custom_call.1} parent=11 // pred_check
          %p370 = pneg %p101
        $region18: #{tpu_custom_call.1} parent=11 // pred_check_branch
          %372 = sbr.rel (%p370) target = $region20
        $region19: #{tpu_custom_call.1} parent=11 // pred_region
          _
        $region20: #{tpu_custom_call.1} parent=11 // pred_fallthru
          _
        // Predicated region
        $region21: #{tpu_custom_call.1} parent=11 // pred_check
          %p373 = pneg %p122
        $region22: #{tpu_custom_call.1} parent=11 // pred_check_branch
          %375 = sbr.rel (%p373) target = $region24
        $region23: #{tpu_custom_call.1} parent=11 // pred_region
          %s377 = ssub.s32 1024, 1024
          %378 = vsyncadd [#allocation6], %s377
          %s379 = sshll.u32 [#allocation7], 4
          %s380 = int_to_ptr.vmem [resolvable:$true] %s379
          %385 = dma.hbm_to_vmem [thread:$0]  %s3, 1024, %s380, [#allocation6], 64, 64, 4
        $region24: #{tpu_custom_call.1} parent=11 // pred_fallthru
          _
        // Predicated region
        $region25: #{tpu_custom_call.1} parent=11 // pred_check
          %p386 = pneg %p143
        $region26: #{tpu_custom_call.1} parent=11 // pred_check_branch
          %388 = sbr.rel (%p386) target = $region28
        $region27: #{tpu_custom_call.1} parent=11 // pred_region
          _
        $region28: #{tpu_custom_call.1} parent=11 // pred_fallthru
          _
        // Predicated region
        $region29: #{tpu_custom_call.1} parent=11 // pred_check
          %p389 = pneg %p164
        $region30: #{tpu_custom_call.1} parent=11 // pred_check_branch
          %391 = sbr.rel (%p389) target = $region32
        $region31: #{tpu_custom_call.1} parent=11 // pred_region
          %s393 = ssub.s32 256, 256
          %394 = vsyncadd [#allocation9], %s393
          %s395 = sshll.u32 [#allocation8], 4
          %s396 = int_to_ptr.vmem [resolvable:$true] %s395
          %401 = dma.hbm_to_vmem [thread:$0]  %s5, 256, %s396, [#allocation9], 128, 128, 8
        $region32: #{tpu_custom_call.1} parent=11 // pred_fallthru
          _
        // Predicated region
        $region33: #{tpu_custom_call.1} parent=11 // pred_check
          %p402 = pneg %p185
        $region34: #{tpu_custom_call.1} parent=11 // pred_check_branch
          %404 = sbr.rel (%p402) target = $region36
        $region35: #{tpu_custom_call.1} parent=11 // pred_region
          %s406 = ssub.s32 256, 256
          %407 = vsyncadd [#allocation9], %s406
          %s408 = sshll.u32 [#allocation10], 4
          %s409 = int_to_ptr.vmem [resolvable:$true] %s408
          %414 = dma.hbm_to_vmem [thread:$0]  %s6, 256, %s409, [#allocation9], 128, 128, 8
        $region36: #{tpu_custom_call.1} parent=11 // pred_fallthru
          _
        // Predicated region
        $region37: #{tpu_custom_call.1} parent=11 // pred_check
          %p415 = pneg %p206
        $region38: #{tpu_custom_call.1} parent=11 // pred_check_branch
          %417 = sbr.rel (%p415) target = $region40
        $region39: #{tpu_custom_call.1} parent=11 // pred_region
          %s419 = ssub.s32 256, 256
          %420 = vsyncadd [#allocation12], %s419
          %s421 = sshll.u32 [#allocation11], 4
          %s422 = int_to_ptr.vmem [resolvable:$true] %s421
          %427 = dma.hbm_to_vmem [thread:$0]  %s7, 256, %s422, [#allocation12], 128, 128, 8
        $region40: #{tpu_custom_call.1} parent=11 // pred_fallthru
          _
        // Predicated region
        $region41: #{tpu_custom_call.1} parent=11 // pred_check
          %p428 = pneg %p227
        $region42: #{tpu_custom_call.1} parent=11 // pred_check_branch
          %430 = sbr.rel (%p428) target = $region44
        $region43: #{tpu_custom_call.1} parent=11 // pred_region
          %s432 = ssub.s32 256, 256
          %433 = vsyncadd [#allocation12], %s432
          %s434 = sshll.u32 [#allocation13], 4
          %s435 = int_to_ptr.vmem [resolvable:$true] %s434
          %440 = dma.hbm_to_vmem [thread:$0]  %s8, 256, %s435, [#allocation12], 128, 128, 8
        $region44: #{tpu_custom_call.1} parent=11 // pred_fallthru
          _
        // Predicated region
        $region45: #{tpu_custom_call.1} parent=11 // pred_check
          %p441 = pneg %p248
        $region46: #{tpu_custom_call.1} parent=11 // pred_check_branch
          %443 = sbr.rel (%p441) target = $region48
        $region47: #{tpu_custom_call.1} parent=11 // pred_region
          %s445 = ssub.s32 1024, 1024
          %446 = vsyncadd [#allocation15], %s445
          %s447 = sshll.u32 [#allocation14], 4
          %s448 = int_to_ptr.vmem [resolvable:$true] %s447
          %453 = dma.hbm_to_vmem [thread:$0]  %s9, 1024, %s448, [#allocation15], 64, 64, 4
        $region48: #{tpu_custom_call.1} parent=11 // pred_fallthru
          _
        // Predicated region
        $region49: #{tpu_custom_call.1} parent=11 // pred_check
          %p454 = pneg %p269
        $region50: #{tpu_custom_call.1} parent=11 // pred_check_branch
          %456 = sbr.rel (%p454) target = $region52
        $region51: #{tpu_custom_call.1} parent=11 // pred_region
          _
        $region52: #{tpu_custom_call.1} parent=11 // pred_fallthru
          _
        // Predicated region
        $region53: #{tpu_custom_call.1} parent=11 // pred_check
          %p457 = pneg %p290
        $region54: #{tpu_custom_call.1} parent=11 // pred_check_branch
          %459 = sbr.rel (%p457) target = $region56
        $region55: #{tpu_custom_call.1} parent=11 // pred_region
          %s461 = ssub.s32 256, 256
          %462 = vsyncadd [#allocation15], %s461
          %s463 = sshll.u32 [#allocation16], 4
          %s464 = int_to_ptr.vmem [resolvable:$true] %s463
          %469 = dma.hbm_to_vmem [thread:$0]  %s11, 256, %s464, [#allocation15], 128, 128, 8
        $region56: #{tpu_custom_call.1} parent=11 // pred_fallthru
          _
      $region12: #{tpu_custom_call.1} parent=5 // pred_fallthru
        _
      %p470 = scmp.lt.s32.totalorder %s33, 2
      // Predicated region
      $region57: #{tpu_custom_call.1} parent=5 // pred_check
        %p471 = pneg %p470
      $region58: #{tpu_custom_call.1} parent=5 // pred_check_branch
        %473 = sbr.rel (%p471) target = $region60
      $region59: #{tpu_custom_call.1} parent=5 // pred_region
        // Predicated region
        $region61: #{tpu_custom_call.1} parent=59 // pred_check
          %p474 = pneg %p53
        $region62: #{tpu_custom_call.1} parent=59 // pred_check_branch
          %476 = sbr.rel (%p474) target = $region64
        $region63: #{tpu_custom_call.1} parent=59 // pred_region
          %s477 = sand.u32 %s43, 1
          %s478 = scalar_lea.sflag [#allocation3], %s477
          %s479 = sand.u32 %s43, 1
          %s480 = smul.addr %s479, 8
          %s481 = scalar_lea.vmem [#allocation2], %s480
          %s483 = ssub.s32 128, 128
          %484 = vsyncadd %s478, %s483
          %s485 = smul.addr %s33, 2
          %s486 = smul.addr %s485, 64
          %s487 = scalar_lea.hbm %s0, %s486
          %s488 = sshll.u32 %s481, 4
          %s489 = int_to_ptr.vmem [resolvable:$true] %s488
          %494 = dma.hbm_to_vmem [thread:$0]  %s487, 128, %s489, %s478, 64, 64, 4
        $region64: #{tpu_custom_call.1} parent=59 // pred_fallthru
          _
      $region60: #{tpu_custom_call.1} parent=5 // pred_fallthru
        _
      %p495 = scmp.le.s32.totalorder 1, %s33
      %p496 = scmp.lt.s32.totalorder %s33, 3
      %p497 = pnand %p495, %p496
      %p498 = pneg %p497
      // Predicated region
      $region65: #{tpu_custom_call.1} parent=5 // pred_check
        _
      $region66: #{tpu_custom_call.1} parent=5 // pred_check_branch
        %500 = sbr.rel (%p497) target = $region68
      $region67: #{tpu_custom_call.1} parent=5 // pred_region
        %s501 = ssub.s32 %s33, 1
        %s502 = sand.u32 %s46, 1
        %s503 = scalar_lea.sflag [#allocation3], %s502
        %s504 = sand.u32 %s46, 1
        %s505 = smul.addr %s504, 8
        %s506 = scalar_lea.vmem [#allocation2], %s505
        // Predicated region
        $region69: #{tpu_custom_call.1} parent=67 // pred_check
          %p507 = pneg %p59
        $region70: #{tpu_custom_call.1} parent=67 // pred_check_branch
          %509 = sbr.rel (%p507) target = $region72
        $region71: #{tpu_custom_call.1} parent=67 // pred_region
          %510 = dma.done %s503, 128
        $region72: #{tpu_custom_call.1} parent=67 // pred_fallthru
          _
        // Predicated region
        $region73: #{tpu_custom_call.1} parent=67 // pred_check
          %p511 = pneg %p80
        $region74: #{tpu_custom_call.1} parent=67 // pred_check_branch
          %513 = sbr.rel (%p511) target = $region76
        $region75: #{tpu_custom_call.1} parent=67 // pred_region
          %514 = dma.done [#allocation6], 2048
        $region76: #{tpu_custom_call.1} parent=67 // pred_fallthru
          _
        // Predicated region
        $region77: #{tpu_custom_call.1} parent=67 // pred_check
          %p515 = pneg %p122
        $region78: #{tpu_custom_call.1} parent=67 // pred_check_branch
          %517 = sbr.rel (%p515) target = $region80
        $region79: #{tpu_custom_call.1} parent=67 // pred_region
          %518 = dma.done [#allocation6], 1024
        $region80: #{tpu_custom_call.1} parent=67 // pred_fallthru
          _
        // Predicated region
        $region81: #{tpu_custom_call.1} parent=67 // pred_check
          %p519 = pneg %p164
        $region82: #{tpu_custom_call.1} parent=67 // pred_check_branch
          %521 = sbr.rel (%p519) target = $region84
        $region83: #{tpu_custom_call.1} parent=67 // pred_region
          %522 = dma.done [#allocation9], 256
        $region84: #{tpu_custom_call.1} parent=67 // pred_fallthru
          _
        // Predicated region
        $region85: #{tpu_custom_call.1} parent=67 // pred_check
          %p523 = pneg %p185
        $region86: #{tpu_custom_call.1} parent=67 // pred_check_branch
          %525 = sbr.rel (%p523) target = $region88
        $region87: #{tpu_custom_call.1} parent=67 // pred_region
          %526 = dma.done [#allocation9], 256
        $region88: #{tpu_custom_call.1} parent=67 // pred_fallthru
          _
        // Predicated region
        $region89: #{tpu_custom_call.1} parent=67 // pred_check
          %p527 = pneg %p206
        $region90: #{tpu_custom_call.1} parent=67 // pred_check_branch
          %529 = sbr.rel (%p527) target = $region92
        $region91: #{tpu_custom_call.1} parent=67 // pred_region
          %530 = dma.done [#allocation12], 256
        $region92: #{tpu_custom_call.1} parent=67 // pred_fallthru
          _
        // Predicated region
        $region93: #{tpu_custom_call.1} parent=67 // pred_check
          %p531 = pneg %p227
        $region94: #{tpu_custom_call.1} parent=67 // pred_check_branch
          %533 = sbr.rel (%p531) target = $region96
        $region95: #{tpu_custom_call.1} parent=67 // pred_region
          %534 = dma.done [#allocation12], 256
        $region96: #{tpu_custom_call.1} parent=67 // pred_fallthru
          _
        // Predicated region
        $region97: #{tpu_custom_call.1} parent=67 // pred_check
          %p535 = pneg %p248
        $region98: #{tpu_custom_call.1} parent=67 // pred_check_branch
          %537 = sbr.rel (%p535) target = $region100
        $region99: #{tpu_custom_call.1} parent=67 // pred_region
          %538 = dma.done [#allocation15], 1024
        $region100: #{tpu_custom_call.1} parent=67 // pred_fallthru
          _
        // Predicated region
        $region101: #{tpu_custom_call.1} parent=67 // pred_check
          %p539 = pneg %p290
        $region102: #{tpu_custom_call.1} parent=67 // pred_check_branch
          %541 = sbr.rel (%p539) target = $region104
        $region103: #{tpu_custom_call.1} parent=67 // pred_region
          %542 = dma.done [#allocation15], 256
        $region104: #{tpu_custom_call.1} parent=67 // pred_fallthru
          _
        %s543 = sand.u32 %s46, 1
        %s544 = scalar_lea.sflag [#allocation3], %s543
        %s545 = sand.u32 %s46, 1
        %s546 = smul.addr %s545, 8
        %s547 = scalar_lea.vmem [#allocation2], %s546
        %p548 = pneg %p59
        %p549 = pneg %p56
        %p550 = pneg %p80
        %p551 = pneg %p77
        %p552 = pneg %p101
        %p553 = pneg %p98
        %p554 = pneg %p122
        %p555 = pneg %p119
        %p556 = pneg %p143
        %p557 = pneg %p140
        %p558 = pneg %p164
        %p559 = pneg %p161
        %p560 = pneg %p185
        %p561 = pneg %p182
        %p562 = pneg %p206
        %p563 = pneg %p203
        %p564 = pneg %p227
        %p565 = pneg %p224
        %p566 = pneg %p248
        %p567 = pneg %p245
        %p568 = pneg %p269
        %p569 = pneg %p266
        %p570 = pneg %p290
        %p571 = pneg %p287
        %p572 = pneg %p316
        %p573 = pneg %p313
        %s574 = sand.u32 %s303, 1
        %s575 = scalar_lea.sflag [#allocation4], %s574
        %s576 = sand.u32 %s303, 1
        %s577 = smul.addr %s576, 8
        %s578 = scalar_lea.vmem [#allocation17], %s577
        %p579 = pneg %p342
        %p580 = pneg %p339
        %s581 = sand.u32 %s329, 1
        %s582 = scalar_lea.sflag [#allocation19], %s581
        %s583 = sand.u32 %s329, 1
        %s584 = smul.addr %s583, 8
        %s585 = scalar_lea.vmem [#allocation18], %s584
        %v587 = vld [vmem:[%s506] sm:$0xf]
        %v588 = vld [vmem:[%s506 + $0x4] sm:$0xf]
        %v589 = vld [vmem:[#allocation5] sm:$0xff]
        %v590 = vld [vmem:[#allocation5 + $0x8] sm:$0xff]
        %v591 = vld [vmem:[#allocation5 + $0x10] sm:$0xff]
        %v592 = vld [vmem:[#allocation5 + $0x18] sm:$0xff]
        %v593 = vld [vmem:[#allocation5 + $0x20] sm:$0xff]
        %v594 = vld [vmem:[#allocation5 + $0x28] sm:$0xff]
        %v595 = vld [vmem:[#allocation5 + $0x30] sm:$0xff]
        %v596 = vld [vmem:[#allocation5 + $0x38] sm:$0xff]
        %v597 = vld [vmem:[#allocation5 + $0x40] sm:$0xff]
        %v598 = vld [vmem:[#allocation5 + $0x48] sm:$0xff]
        %v599 = vld [vmem:[#allocation5 + $0x50] sm:$0xff]
        %v600 = vld [vmem:[#allocation5 + $0x58] sm:$0xff]
        %v601 = vld [vmem:[#allocation5 + $0x60] sm:$0xff]
        %v602 = vld [vmem:[#allocation5 + $0x68] sm:$0xff]
        %v603 = vld [vmem:[#allocation5 + $0x70] sm:$0xff]
        %v604 = vld [vmem:[#allocation5 + $0x78] sm:$0xff]
        %v605 = vld [vmem:[%s2] sm:$0x3]
        %v607 = vlaneseq
        %v608 = vshrl.u32 %v607, 7
        %v609 = vsub.s32 0, %v608
        %v610 = vrot.slane %v605, %v609
        %v611 = vlaneseq
        %v612 = vshrl.u32 %v611, 7
        %v613 = vsub.s32 1, %v612
        %v614 = vrot.slane %v605, %v613
        %v619 = vunpack.c.l.b16 %v587
        %v620 = vunpack.c.l.b16 %v588
        %v621 = vpack.c.b16 %v620, %v619
        %v639 = vunpack.c.l.b16 %v589
        %v640 = vunpack.c.h.b16 %v589
        %v641 = vunpack.c.l.b16 %v590
        %v642 = vunpack.c.h.b16 %v590
        %v643 = vunpack.c.l.b16 %v591
        %v644 = vunpack.c.h.b16 %v591
        %v645 = vunpack.c.l.b16 %v592
        %v646 = vunpack.c.h.b16 %v592
        %v647 = vunpack.c.l.b16 %v593
        %v648 = vunpack.c.h.b16 %v593
        %v649 = vunpack.c.l.b16 %v594
        %v650 = vunpack.c.h.b16 %v594
        %v651 = vunpack.c.l.b16 %v595
        %v652 = vunpack.c.h.b16 %v595
        %v653 = vunpack.c.l.b16 %v596
        %v654 = vunpack.c.h.b16 %v596
        %v655 = vunpack.c.l.b16 %v597
        %v656 = vunpack.c.h.b16 %v597
        %v657 = vunpack.c.l.b16 %v598
        %v658 = vunpack.c.h.b16 %v598
        %v659 = vunpack.c.l.b16 %v599
        %v660 = vunpack.c.h.b16 %v599
        %v661 = vunpack.c.l.b16 %v600
        %v662 = vunpack.c.h.b16 %v600
        %v663 = vunpack.c.l.b16 %v601
        %v664 = vunpack.c.h.b16 %v601
        %v665 = vunpack.c.l.b16 %v602
        %v666 = vunpack.c.h.b16 %v602
        %v667 = vunpack.c.l.b16 %v603
        %v668 = vunpack.c.h.b16 %v603
        %v669 = vunpack.c.l.b16 %v604
        %v670 = vunpack.c.h.b16 %v604
        %v671 = vpack.c.b16 %v641, %v639
        %v672 = vpack.c.b16 %v642, %v640
        %v673 = vpack.c.b16 %v645, %v643
        %v674 = vpack.c.b16 %v646, %v644
        %v675 = vpack.c.b16 %v649, %v647
        %v676 = vpack.c.b16 %v650, %v648
        %v677 = vpack.c.b16 %v653, %v651
        %v678 = vpack.c.b16 %v654, %v652
        %v679 = vpack.c.b16 %v657, %v655
        %v680 = vpack.c.b16 %v658, %v656
        %v681 = vpack.c.b16 %v661, %v659
        %v682 = vpack.c.b16 %v662, %v660
        %v683 = vpack.c.b16 %v665, %v663
        %v684 = vpack.c.b16 %v666, %v664
        %v685 = vpack.c.b16 %v669, %v667
        %v686 = vpack.c.b16 %v670, %v668
        %703 = vmatprep.subr.bf16.mxu0 %v672
        %704 = vmatpush1.bf16.msra.mxu0 %v671
        %705 = vmatprep.subr.bf16.mxu0 %v674
        %706 = vmatpush1.bf16.msra.mxu0 %v673
        %707 = vmatprep.subr.bf16.mxu0 %v676
        %708 = vmatpush1.bf16.msra.mxu0 %v675
        %709 = vmatprep.subr.bf16.mxu0 %v678
        %710 = vmatpush1.bf16.msra.mxu0 %v677
        %711 = vmatprep.subr.bf16.mxu0 %v680
        %712 = vmatpush1.bf16.msra.mxu0 %v679
        %713 = vmatprep.subr.bf16.mxu0 %v682
        %714 = vmatpush1.bf16.msra.mxu0 %v681
        %715 = vmatprep.subr.bf16.mxu0 %v684
        %716 = vmatpush1.bf16.msra.mxu0 %v683
        %717 = vmatprep.subr.bf16.mxu0 %v686
        %718 = vmatpush1.bf16.msra.mxu0 %v685
        %719 = vmatprep.subr.bf16.mxu0 0
        %720 = vmatpush1.bf16.msra.mxu0 0
        %721 = vmatprep.subr.bf16.mxu0 0
        %722 = vmatpush1.bf16.msra.mxu0 0
        %723 = vmatprep.subr.bf16.mxu0 0
        %724 = vmatpush1.bf16.msra.mxu0 0
        %725 = vmatprep.subr.bf16.mxu0 0
        %726 = vmatpush1.bf16.msra.mxu0 0
        %727 = vmatprep.subr.bf16.mxu0 0
        %728 = vmatpush1.bf16.msra.mxu0 0
        %729 = vmatprep.subr.bf16.mxu0 0
        %730 = vmatpush1.bf16.msra.mxu0 0
        %731 = vmatprep.subr.bf16.mxu0 0
        %732 = vmatpush1.bf16.msra.mxu0 0
        %733 = vmatprep.subr.bf16.mxu0 0
        %734 = vmatpush1.bf16.msra.mxu0 0
        %735 = vmatprep.mubr.bf16.mxu0 0
        %736 = vmatmul.mubr.bf16.gmra.mrb[0].mxu0 %v621
        %v737 = vpop.f32.mrb[0].mxu0
        %v738 = vadd.f32 %v610, %v737
        %v739 = vpop.f32.mrb[0].mxu0
        %v740 = vadd.f32 %v614, %v739
        %v741 = vpop.f32.mrb[0].mxu0
        %v742 = vadd.f32 %v610, %v741
        %v743 = vpop.f32.mrb[0].mxu0
        %v744 = vadd.f32 %v614, %v743
        %745 = vdwg.mxu0
        %v746 = vld [vmem:[#allocation8] sm:$0xff]
        %v747 = vld [vmem:[#allocation8 + $0x8] sm:$0xff]
        %v748 = vmul.f32 %v738, %v746
        %v749 = vmul.f32 %v742, %v747
        %v750 = vpack.c.bf16 %v742, %v738
        %v751 = vld [vmem:[#allocation14] sm:$0xf]
        %v752 = vld [vmem:[#allocation14 + $0x4] sm:$0xf]
        %v753 = vld [vmem:[#allocation14 + $0x8] sm:$0xf]
        %v754 = vld [vmem:[#allocation14 + $0xc] sm:$0xf]
        %v755 = vld [vmem:[#allocation14 + $0x10] sm:$0xf]
        %v756 = vld [vmem:[#allocation14 + $0x14] sm:$0xf]
        %v757 = vld [vmem:[#allocation14 + $0x18] sm:$0xf]
        %v758 = vld [vmem:[#allocation14 + $0x1c] sm:$0xf]
        %v759 = vld [vmem:[#allocation14 + $0x20] sm:$0xf]
        %v760 = vld [vmem:[#allocation14 + $0x24] sm:$0xf]
        %v761 = vld [vmem:[#allocation14 + $0x28] sm:$0xf]
        %v762 = vld [vmem:[#allocation14 + $0x2c] sm:$0xf]
        %v763 = vld [vmem:[#allocation14 + $0x30] sm:$0xf]
        %v764 = vld [vmem:[#allocation14 + $0x34] sm:$0xf]
        %v765 = vld [vmem:[#allocation14 + $0x38] sm:$0xf]
        %v766 = vld [vmem:[#allocation14 + $0x3c] sm:$0xf]
        %v783 = vunpack.c.l.b16 %v751
        %v784 = vunpack.c.l.b16 %v752
        %v785 = vunpack.c.l.b16 %v753
        %v786 = vunpack.c.l.b16 %v754
        %v787 = vunpack.c.l.b16 %v755
        %v788 = vunpack.c.l.b16 %v756
        %v789 = vunpack.c.l.b16 %v757
        %v790 = vunpack.c.l.b16 %v758
        %v791 = vunpack.c.l.b16 %v759
        %v792 = vunpack.c.l.b16 %v760
        %v793 = vunpack.c.l.b16 %v761
        %v794 = vunpack.c.l.b16 %v762
        %v795 = vunpack.c.l.b16 %v763
        %v796 = vunpack.c.l.b16 %v764
        %v797 = vunpack.c.l.b16 %v765
        %v798 = vunpack.c.l.b16 %v766
        %v799 = vpack.c.b16 %v784, %v783
        %v800 = vpack.c.b16 %v786, %v785
        %v801 = vpack.c.b16 %v788, %v787
        %v802 = vpack.c.b16 %v790, %v789
        %v803 = vpack.c.b16 %v792, %v791
        %v804 = vpack.c.b16 %v794, %v793
        %v805 = vpack.c.b16 %v796, %v795
        %v806 = vpack.c.b16 %v798, %v797
        %815 = vmatprep.subr.bf16.mxu0 0
        %816 = vmatpush1.bf16.msra.mxu0 %v799
        %817 = vmatprep.subr.bf16.mxu0 0
        %818 = vmatpush1.bf16.msra.mxu0 %v800
        %819 = vmatprep.subr.bf16.mxu0 0
        %820 = vmatpush1.bf16.msra.mxu0 %v801
        %821 = vmatprep.subr.bf16.mxu0 0
        %822 = vmatpush1.bf16.msra.mxu0 %v802
        %823 = vmatprep.subr.bf16.mxu0 0
        %824 = vmatpush1.bf16.msra.mxu0 %v803
        %825 = vmatprep.subr.bf16.mxu0 0
        %826 = vmatpush1.bf16.msra.mxu0 %v804
        %827 = vmatprep.subr.bf16.mxu0 0
        %828 = vmatpush1.bf16.msra.mxu0 %v805
        %829 = vmatprep.subr.bf16.mxu0 0
        %830 = vmatpush1.bf16.msra.mxu0 %v806
        %831 = vmatprep.subr.bf16.mxu0 0
        %832 = vmatpush1.bf16.msra.mxu0 0
        %833 = vmatprep.subr.bf16.mxu0 0
        %834 = vmatpush1.bf16.msra.mxu0 0
        %835 = vmatprep.subr.bf16.mxu0 0
        %836 = vmatpush1.bf16.msra.mxu0 0
        %837 = vmatprep.subr.bf16.mxu0 0
        %838 = vmatpush1.bf16.msra.mxu0 0
        %839 = vmatprep.subr.bf16.mxu0 0
        %840 = vmatpush1.bf16.msra.mxu0 0
        %841 = vmatprep.subr.bf16.mxu0 0
        %842 = vmatpush1.bf16.msra.mxu0 0
        %843 = vmatprep.subr.bf16.mxu0 0
        %844 = vmatpush1.bf16.msra.mxu0 0
        %845 = vmatprep.subr.bf16.mxu0 0
        %846 = vmatpush1.bf16.msra.mxu0 0
        %847 = vmatprep.mubr.bf16.mxu0 0
        %848 = vmatmul.mubr.bf16.gmra.mrb[0].mxu0 %v750
        %v849 = vpop.f32.mrb[0].mxu0
        %v850 = vadd.f32 0.0, %v849
        %v851 = vpop.f32.mrb[0].mxu0
        %v852 = vpop.f32.mrb[0].mxu0
        %v853 = vadd.f32 0.0, %v852
        %v854 = vpop.f32.mrb[0].mxu0
        %855 = vdwg.mxu0
        %v856 = vld [vmem:[#allocation10] sm:$0xff]
        %v857 = vld [vmem:[#allocation10 + $0x8] sm:$0xff]
        %v858 = vmul.f32 %v850, %v856
        %v859 = vmul.f32 %v853, %v857
        %v860 = vadd.f32 %v748, %v858
        %v861 = vadd.f32 %v749, %v859
        %v862 = vld [vmem:[#allocation11] sm:$0xff]
        %v863 = vld [vmem:[#allocation11 + $0x8] sm:$0xff]
        %v864 = vmul.f32 %v740, %v862
        %v865 = vmul.f32 %v744, %v863
        %v866 = vpack.c.bf16 %v744, %v740
        %v867 = vld [vmem:[%s10] sm:$0xf]
        %v868 = vld [vmem:[%s10 + $0x4] sm:$0xf]
        %v869 = vld [vmem:[%s10 + $0x8] sm:$0xf]
        %v870 = vld [vmem:[%s10 + $0xc] sm:$0xf]
        %v871 = vld [vmem:[%s10 + $0x10] sm:$0xf]
        %v872 = vld [vmem:[%s10 + $0x14] sm:$0xf]
        %v873 = vld [vmem:[%s10 + $0x18] sm:$0xf]
        %v874 = vld [vmem:[%s10 + $0x1c] sm:$0xf]
        %v883 = vunpack.c.l.b16 %v867
        %v884 = vunpack.c.l.b16 %v868
        %v885 = vunpack.c.l.b16 %v869
        %v886 = vunpack.c.l.b16 %v870
        %v887 = vunpack.c.l.b16 %v871
        %v888 = vunpack.c.l.b16 %v872
        %v889 = vunpack.c.l.b16 %v873
        %v890 = vunpack.c.l.b16 %v874
        %v891 = vpack.c.b16 %v884, %v883
        %v892 = vpack.c.b16 %v886, %v885
        %v893 = vpack.c.b16 %v888, %v887
        %v894 = vpack.c.b16 %v890, %v889
        %vm899 = vcmask 523264
        %v901 = vsel %vm899, %v866, 0
        %903 = vmatprep.subr.bf16.mxu0 0
        %904 = vmatpush1.bf16.msra.mxu0 %v891
        %905 = vmatprep.subr.bf16.mxu0 0
        %906 = vmatpush1.bf16.msra.mxu0 %v892
        %907 = vmatprep.subr.bf16.mxu0 0
        %908 = vmatpush1.bf16.msra.mxu0 %v893
        %909 = vmatprep.subr.bf16.mxu0 0
        %910 = vmatpush1.bf16.msra.mxu0 %v894
        %911 = vmatprep.subr.bf16.mxu0 0
        %912 = vmatpush1.bf16.msra.mxu0 0
        %913 = vmatprep.subr.bf16.mxu0 0
        %914 = vmatpush1.bf16.msra.mxu0 0
        %915 = vmatprep.subr.bf16.mxu0 0
        %916 = vmatpush1.bf16.msra.mxu0 0
        %917 = vmatprep.subr.bf16.mxu0 0
        %918 = vmatpush1.bf16.msra.mxu0 0
        %919 = vmatprep.subr.bf16.mxu0 0
        %920 = vmatpush1.bf16.msra.mxu0 0
        %921 = vmatprep.subr.bf16.mxu0 0
        %922 = vmatpush1.bf16.msra.mxu0 0
        %923 = vmatprep.subr.bf16.mxu0 0
        %924 = vmatpush1.bf16.msra.mxu0 0
        %925 = vmatprep.subr.bf16.mxu0 0
        %926 = vmatpush1.bf16.msra.mxu0 0
        %927 = vmatprep.subr.bf16.mxu0 0
        %928 = vmatpush1.bf16.msra.mxu0 0
        %929 = vmatprep.subr.bf16.mxu0 0
        %930 = vmatpush1.bf16.msra.mxu0 0
        %931 = vmatprep.subr.bf16.mxu0 0
        %932 = vmatpush1.bf16.msra.mxu0 0
        %933 = vmatprep.subr.bf16.mxu0 0
        %934 = vmatpush1.bf16.msra.mxu0 0
        %935 = vmatprep.mubr.bf16.mxu0 0
        %936 = vmatmul.mubr.bf16.gmra.mrb[0].mxu0 %v901
        %v937 = vpop.f32.mrb[0].mxu0
        %v938 = vadd.f32 0.0, %v937
        %v939 = vpop.f32.mrb[0].mxu0
        %v940 = vpop.f32.mrb[0].mxu0
        %v941 = vadd.f32 0.0, %v940
        %v942 = vpop.f32.mrb[0].mxu0
        %943 = vdwg.mxu0
        %v944 = vld [vmem:[#allocation13] sm:$0xff]
        %v945 = vld [vmem:[#allocation13 + $0x8] sm:$0xff]
        %v946 = vmul.f32 %v938, %v944
        %v947 = vmul.f32 %v941, %v945
        %v948 = vadd.f32 %v864, %v946
        %v949 = vadd.f32 %v865, %v947
        %v950 = vpack.c.bf16 %v861, %v860
        %v951 = vpack.c.bf16 %v949, %v948
        %v953 = vsel %vm899, %v951, %v866
        %v955 = vunpack.c.l.b16 %v953
        %v956 = vunpack.c.h.b16 %v953
        %v957 = vpack.c.b16 %v955, %v955
        %v958 = vpack.c.b16 %v956, %v956
        %961 = vst [vmem:[%s585] sm:$0xf] %v957
        %962 = vst [vmem:[%s585 + $0x4] sm:$0xf] %v958
        %964 = vrot.lane.b32.xlu0 %v950, 96
        %v965 = vpop.permute.xlu0 %964
        %966 = vrot.lane.b32.xlu0 %v950, 64
        %v967 = vpop.permute.xlu0 %966
        %968 = vrot.lane.b32.xlu0 %v950, 32
        %v969 = vpop.permute.xlu0 %968
        %971 = vrot.lane.b32.xlu0 %v951, 96
        %v972 = vpop.permute.xlu0 %971
        %974 = vrot.lane.b32.xlu0 %v866, 96
        %v975 = vpop.permute.xlu0 %974
        %v976 = vld [vmem:[#allocation16] sm:$0xff]
        %v977 = vld [vmem:[#allocation16 + $0x8] sm:$0xff]
        %vm978 = vcmask 261120
        %v980 = vsel %vm978, %v950, 0
        %v982 = vsel %vm978, %v951, 0
        %984 = vmatprep.subr.bf16.mxu0 0
        %985 = vmatpush1.bf16.xpose.msra.mxu0 %v982
        %986 = vmatprep.subr.bf16.mxu0 0
        %987 = vmatpush1.bf16.xpose.msra.mxu0 0
        %988 = vmatprep.subr.bf16.mxu0 0
        %989 = vmatpush1.bf16.xpose.msra.mxu0 0
        %990 = vmatprep.subr.bf16.mxu0 0
        %991 = vmatpush1.bf16.xpose.msra.mxu0 0
        %992 = vmatprep.subr.bf16.mxu0 0
        %993 = vmatpush1.bf16.xpose.msra.mxu0 0
        %994 = vmatprep.subr.bf16.mxu0 0
        %995 = vmatpush1.bf16.xpose.msra.mxu0 0
        %996 = vmatprep.subr.bf16.mxu0 0
        %997 = vmatpush1.bf16.xpose.msra.mxu0 0
        %998 = vmatprep.subr.bf16.mxu0 0
        %999 = vmatpush1.bf16.xpose.msra.mxu0 0
        %1000 = vmatprep.subr.bf16.mxu0 0
        %1001 = vmatpush1.bf16.xpose.msra.mxu0 0
        %1002 = vmatprep.subr.bf16.mxu0 0
        %1003 = vmatpush1.bf16.xpose.msra.mxu0 0
        %1004 = vmatprep.subr.bf16.mxu0 0
        %1005 = vmatpush1.bf16.xpose.msra.mxu0 0
        %1006 = vmatprep.subr.bf16.mxu0 0
        %1007 = vmatpush1.bf16.xpose.msra.mxu0 0
        %1008 = vmatprep.subr.bf16.mxu0 0
        %1009 = vmatpush1.bf16.xpose.msra.mxu0 0
        %1010 = vmatprep.subr.bf16.mxu0 0
        %1011 = vmatpush1.bf16.xpose.msra.mxu0 0
        %1012 = vmatprep.subr.bf16.mxu0 0
        %1013 = vmatpush1.bf16.xpose.msra.mxu0 0
        %1014 = vmatprep.subr.bf16.mxu0 0
        %1015 = vmatpush1.bf16.xpose.msra.mxu0 0
        %1016 = vmatprep.mubr.bf16.mxu0 0
        %1017 = vmatmul.mubr.bf16.gmra.mrb[0].mxu0 %v980
        %v1018 = vpop.f32.mrb[0].mxu0
        %v1019 = vadd.f32 %v976, %v1018
        %v1020 = vpop.f32.mrb[0].mxu0
        %v1021 = vpop.f32.mrb[0].mxu0
        %v1022 = vadd.f32 %v977, %v1021
        %v1023 = vpop.f32.mrb[0].mxu0
        %1024 = vdwg.mxu0
        %v1026 = vsel %vm978, %v965, 0
        %1028 = vmatprep.subr.bf16.mxu0 0
        %1029 = vmatpush1.bf16.xpose.msra.mxu0 %v982
        %1030 = vmatprep.subr.bf16.mxu0 0
        %1031 = vmatpush1.bf16.xpose.msra.mxu0 0
        %1032 = vmatprep.subr.bf16.mxu0 0
        %1033 = vmatpush1.bf16.xpose.msra.mxu0 0
        %1034 = vmatprep.subr.bf16.mxu0 0
        %1035 = vmatpush1.bf16.xpose.msra.mxu0 0
        %1036 = vmatprep.subr.bf16.mxu0 0
        %1037 = vmatpush1.bf16.xpose.msra.mxu0 0
        %1038 = vmatprep.subr.bf16.mxu0 0
        %1039 = vmatpush1.bf16.xpose.msra.mxu0 0
        %1040 = vmatprep.subr.bf16.mxu0 0
        %1041 = vmatpush1.bf16.xpose.msra.mxu0 0
        %1042 = vmatprep.subr.bf16.mxu0 0
        %1043 = vmatpush1.bf16.xpose.msra.mxu0 0
        %1044 = vmatprep.subr.bf16.mxu0 0
        %1045 = vmatpush1.bf16.xpose.msra.mxu0 0
        %1046 = vmatprep.subr.bf16.mxu0 0
        %1047 = vmatpush1.bf16.xpose.msra.mxu0 0
        %1048 = vmatprep.subr.bf16.mxu0 0
        %1049 = vmatpush1.bf16.xpose.msra.mxu0 0
        %1050 = vmatprep.subr.bf16.mxu0 0
        %1051 = vmatpush1.bf16.xpose.msra.mxu0 0
        %1052 = vmatprep.subr.bf16.mxu0 0
        %1053 = vmatpush1.bf16.xpose.msra.mxu0 0
        %1054 = vmatprep.subr.bf16.mxu0 0
        %1055 = vmatpush1.bf16.xpose.msra.mxu0 0
        %1056 = vmatprep.subr.bf16.mxu0 0
        %1057 = vmatpush1.bf16.xpose.msra.mxu0 0
        %1058 = vmatprep.subr.bf16.mxu0 0
        %1059 = vmatpush1.bf16.xpose.msra.mxu0 0
        %1060 = vmatprep.mubr.bf16.mxu0 0
        %1061 = vmatmul.mubr.bf16.gmra.mrb[0].mxu0 %v1026
        %v1062 = vpop.f32.mrb[0].mxu0
        %v1063 = vadd.f32 %v976, %v1062
        %v1064 = vpop.f32.mrb[0].mxu0
        %v1065 = vpop.f32.mrb[0].mxu0
        %v1066 = vadd.f32 %v977, %v1065
        %v1067 = vpop.f32.mrb[0].mxu0
        %1068 = vdwg.mxu0
        %v1070 = vsel %vm978, %v967, 0
        %v1073 = vsel %vm978, %v972, 0
        %1075 = vmatprep.subr.bf16.mxu0 0
        %1076 = vmatpush1.bf16.xpose.msra.mxu0 %v1073
        %1077 = vmatprep.subr.bf16.mxu0 0
        %1078 = vmatpush1.bf16.xpose.msra.mxu0 0
        %1079 = vmatprep.subr.bf16.mxu0 0
        %1080 = vmatpush1.bf16.xpose.msra.mxu0 0
        %1081 = vmatprep.subr.bf16.mxu0 0
        %1082 = vmatpush1.bf16.xpose.msra.mxu0 0
        %1083 = vmatprep.subr.bf16.mxu0 0
        %1084 = vmatpush1.bf16.xpose.msra.mxu0 0
        %1085 = vmatprep.subr.bf16.mxu0 0
        %1086 = vmatpush1.bf16.xpose.msra.mxu0 0
        %1087 = vmatprep.subr.bf16.mxu0 0
        %1088 = vmatpush1.bf16.xpose.msra.mxu0 0
        %1089 = vmatprep.subr.bf16.mxu0 0
        %1090 = vmatpush1.bf16.xpose.msra.mxu0 0
        %1091 = vmatprep.subr.bf16.mxu0 0
        %1092 = vmatpush1.bf16.xpose.msra.mxu0 0
        %1093 = vmatprep.subr.bf16.mxu0 0
        %1094 = vmatpush1.bf16.xpose.msra.mxu0 0
        %1095 = vmatprep.subr.bf16.mxu0 0
        %1096 = vmatpush1.bf16.xpose.msra.mxu0 0
        %1097 = vmatprep.subr.bf16.mxu0 0
        %1098 = vmatpush1.bf16.xpose.msra.mxu0 0
        %1099 = vmatprep.subr.bf16.mxu0 0
        %1100 = vmatpush1.bf16.xpose.msra.mxu0 0
        %1101 = vmatprep.subr.bf16.mxu0 0
        %1102 = vmatpush1.bf16.xpose.msra.mxu0 0
        %1103 = vmatprep.subr.bf16.mxu0 0
        %1104 = vmatpush1.bf16.xpose.msra.mxu0 0
        %1105 = vmatprep.subr.bf16.mxu0 0
        %1106 = vmatpush1.bf16.xpose.msra.mxu0 0
        %1107 = vmatprep.mubr.bf16.mxu0 0
        %1108 = vmatmul.mubr.bf16.gmra.mrb[0].mxu0 %v1070
        %v1109 = vpop.f32.mrb[0].mxu0
        %v1110 = vadd.f32 %v976, %v1109
        %v1111 = vpop.f32.mrb[0].mxu0
        %v1112 = vpop.f32.mrb[0].mxu0
        %v1113 = vadd.f32 %v977, %v1112
        %v1114 = vpop.f32.mrb[0].mxu0
        %1115 = vdwg.mxu0
        %v1117 = vsel %vm978, %v969, 0
        %1119 = vmatprep.subr.bf16.mxu0 0
        %1120 = vmatpush1.bf16.xpose.msra.mxu0 %v1073
        %1121 = vmatprep.subr.bf16.mxu0 0
        %1122 = vmatpush1.bf16.xpose.msra.mxu0 0
        %1123 = vmatprep.subr.bf16.mxu0 0
        %1124 = vmatpush1.bf16.xpose.msra.mxu0 0
        %1125 = vmatprep.subr.bf16.mxu0 0
        %1126 = vmatpush1.bf16.xpose.msra.mxu0 0
        %1127 = vmatprep.subr.bf16.mxu0 0
        %1128 = vmatpush1.bf16.xpose.msra.mxu0 0
        %1129 = vmatprep.subr.bf16.mxu0 0
        %1130 = vmatpush1.bf16.xpose.msra.mxu0 0
        %1131 = vmatprep.subr.bf16.mxu0 0
        %1132 = vmatpush1.bf16.xpose.msra.mxu0 0
        %1133 = vmatprep.subr.bf16.mxu0 0
        %1134 = vmatpush1.bf16.xpose.msra.mxu0 0
        %1135 = vmatprep.subr.bf16.mxu0 0
        %1136 = vmatpush1.bf16.xpose.msra.mxu0 0
        %1137 = vmatprep.subr.bf16.mxu0 0
        %1138 = vmatpush1.bf16.xpose.msra.mxu0 0
        %1139 = vmatprep.subr.bf16.mxu0 0
        %1140 = vmatpush1.bf16.xpose.msra.mxu0 0
        %1141 = vmatprep.subr.bf16.mxu0 0
        %1142 = vmatpush1.bf16.xpose.msra.mxu0 0
        %1143 = vmatprep.subr.bf16.mxu0 0
        %1144 = vmatpush1.bf16.xpose.msra.mxu0 0
        %1145 = vmatprep.subr.bf16.mxu0 0
        %1146 = vmatpush1.bf16.xpose.msra.mxu0 0
        %1147 = vmatprep.subr.bf16.mxu0 0
        %1148 = vmatpush1.bf16.xpose.msra.mxu0 0
        %1149 = vmatprep.subr.bf16.mxu0 0
        %1150 = vmatpush1.bf16.xpose.msra.mxu0 0
        %1151 = vmatprep.mubr.bf16.mxu0 0
        %1152 = vmatmul.mubr.bf16.gmra.mrb[0].mxu0 %v1117
        %v1153 = vpop.f32.mrb[0].mxu0
        %v1154 = vadd.f32 %v976, %v1153
        %v1155 = vpop.f32.mrb[0].mxu0
        %v1156 = vpop.f32.mrb[0].mxu0
        %v1157 = vadd.f32 %v977, %v1156
        %v1158 = vpop.f32.mrb[0].mxu0
        %1159 = vdwg.mxu0
        %vm1160 = vcmask 130048
        %v1161 = vsel %vm1160, %v1019, -inf
        %1162 = vmax.xlane.f32.xlu0 %v1161
        %v1163 = vpop.xlane.xlu0 %1162
        %v1164 = vsel %vm1160, %v1022, -inf
        %1165 = vmax.xlane.f32.xlu0 %v1164
        %v1166 = vpop.xlane.xlu0 %1165
        %v1167 = vsel %vm1160, %v1063, -inf
        %1168 = vmax.xlane.f32.xlu0 %v1167
        %v1169 = vpop.xlane.xlu0 %1168
        %v1170 = vsel %vm1160, %v1066, -inf
        %1171 = vmax.xlane.f32.xlu0 %v1170
        %v1172 = vpop.xlane.xlu0 %1171
        %v1173 = vsel %vm1160, %v1110, -inf
        %1174 = vmax.xlane.f32.xlu0 %v1173
        %v1175 = vpop.xlane.xlu0 %1174
        %v1176 = vsel %vm1160, %v1113, -inf
        %1177 = vmax.xlane.f32.xlu0 %v1176
        %v1178 = vpop.xlane.xlu0 %1177
        %v1179 = vsel %vm1160, %v1154, -inf
        %1180 = vmax.xlane.f32.xlu0 %v1179
        %v1181 = vpop.xlane.xlu0 %1180
        %v1182 = vsel %vm1160, %v1157, -inf
        %1183 = vmax.xlane.f32.xlu0 %v1182
        %v1184 = vpop.xlane.xlu0 %1183
        %v1185 = vsub.f32 %v1019, %v1163
        %v1186 = vsub.f32 %v1022, %v1166
        %v1187 = vsub.f32 %v1063, %v1169
        %v1188 = vsub.f32 %v1066, %v1172
        %v1189 = vsub.f32 %v1110, %v1175
        %v1190 = vsub.f32 %v1113, %v1178
        %v1191 = vsub.f32 %v1154, %v1181
        %v1192 = vsub.f32 %v1157, %v1184
        %v1193 = vmul.f32 %v1185, 1.442695
        %v1194 = vpow.pop %v1193
        %v1195 = vmul.f32 %v1186, 1.442695
        %v1196 = vpow.pop %v1195
        %v1197 = vmul.f32 %v1187, 1.442695
        %v1198 = vpow.pop %v1197
        %v1199 = vmul.f32 %v1188, 1.442695
        %v1200 = vpow.pop %v1199
        %v1201 = vmul.f32 %v1189, 1.442695
        %v1202 = vpow.pop %v1201
        %v1203 = vmul.f32 %v1190, 1.442695
        %v1204 = vpow.pop %v1203
        %v1205 = vmul.f32 %v1191, 1.442695
        %v1206 = vpow.pop %v1205
        %v1207 = vmul.f32 %v1192, 1.442695
        %v1208 = vpow.pop %v1207
        %v1209 = vsel %vm1160, %v1194, 0.0
        %1210 = vadd.xlane.f32.xlu0 %v1209
        %v1211 = vpop.xlane.xlu0 %1210
        %v1212 = vsel %vm1160, %v1196, 0.0
        %1213 = vadd.xlane.f32.xlu0 %v1212
        %v1214 = vpop.xlane.xlu0 %1213
        %v1215 = vsel %vm1160, %v1198, 0.0
        %1216 = vadd.xlane.f32.xlu0 %v1215
        %v1217 = vpop.xlane.xlu0 %1216
        %v1218 = vsel %vm1160, %v1200, 0.0
        %1219 = vadd.xlane.f32.xlu0 %v1218
        %v1220 = vpop.xlane.xlu0 %1219
        %v1221 = vsel %vm1160, %v1202, 0.0
        %1222 = vadd.xlane.f32.xlu0 %v1221
        %v1223 = vpop.xlane.xlu0 %1222
        %v1224 = vsel %vm1160, %v1204, 0.0
        %1225 = vadd.xlane.f32.xlu0 %v1224
        %v1226 = vpop.xlane.xlu0 %1225
        %v1227 = vsel %vm1160, %v1206, 0.0
        %1228 = vadd.xlane.f32.xlu0 %v1227
        %v1229 = vpop.xlane.xlu0 %1228
        %v1230 = vsel %vm1160, %v1208, 0.0
        %1231 = vadd.xlane.f32.xlu0 %v1230
        %v1232 = vpop.xlane.xlu0 %1231
        %v1233 = vrcp.pop %v1211
        %v1234 = vrcp.pop %v1214
        %v1235 = vrcp.pop %v1217
        %v1236 = vrcp.pop %v1220
        %v1237 = vrcp.pop %v1223
        %v1238 = vrcp.pop %v1226
        %v1239 = vrcp.pop %v1229
        %v1240 = vrcp.pop %v1232
        %v1241 = vmul.f32 %v1194, %v1233
        %v1242 = vmul.f32 %v1196, %v1234
        %v1243 = vmul.f32 %v1198, %v1235
        %v1244 = vmul.f32 %v1200, %v1236
        %v1245 = vmul.f32 %v1202, %v1237
        %v1246 = vmul.f32 %v1204, %v1238
        %v1247 = vmul.f32 %v1206, %v1239
        %v1248 = vmul.f32 %v1208, %v1240
        %v1249 = vpack.c.bf16 %v1242, %v1241
        %v1250 = vpack.c.bf16 %v1244, %v1243
        %v1251 = vpack.c.bf16 %v1246, %v1245
        %v1252 = vpack.c.bf16 %v1248, %v1247
        %1253 = vrot.lane.b32.xlu0 %v866, 64
        %v1254 = vpop.permute.xlu0 %1253
        %v1257 = vsel %vm1160, %v1249, 0
        %1259 = vmatprep.subr.bf16.mxu0 0
        %1260 = vmatpush1.bf16.msra.mxu0 %v1254
        %1261 = vmatprep.subr.bf16.mxu0 0
        %1262 = vmatpush1.bf16.msra.mxu0 0
        %1263 = vmatprep.subr.bf16.mxu0 0
        %1264 = vmatpush1.bf16.msra.mxu0 0
        %1265 = vmatprep.subr.bf16.mxu0 0
        %1266 = vmatpush1.bf16.msra.mxu0 0
        %1267 = vmatprep.subr.bf16.mxu0 0
        %1268 = vmatpush1.bf16.msra.mxu0 0
        %1269 = vmatprep.subr.bf16.mxu0 0
        %1270 = vmatpush1.bf16.msra.mxu0 0
        %1271 = vmatprep.subr.bf16.mxu0 0
        %1272 = vmatpush1.bf16.msra.mxu0 0
        %1273 = vmatprep.subr.bf16.mxu0 0
        %1274 = vmatpush1.bf16.msra.mxu0 0
        %1275 = vmatprep.subr.bf16.mxu0 0
        %1276 = vmatpush1.bf16.msra.mxu0 0
        %1277 = vmatprep.subr.bf16.mxu0 0
        %1278 = vmatpush1.bf16.msra.mxu0 0
        %1279 = vmatprep.subr.bf16.mxu0 0
        %1280 = vmatpush1.bf16.msra.mxu0 0
        %1281 = vmatprep.subr.bf16.mxu0 0
        %1282 = vmatpush1.bf16.msra.mxu0 0
        %1283 = vmatprep.subr.bf16.mxu0 0
        %1284 = vmatpush1.bf16.msra.mxu0 0
        %1285 = vmatprep.subr.bf16.mxu0 0
        %1286 = vmatpush1.bf16.msra.mxu0 0
        %1287 = vmatprep.subr.bf16.mxu0 0
        %1288 = vmatpush1.bf16.msra.mxu0 0
        %1289 = vmatprep.subr.bf16.mxu0 0
        %1290 = vmatpush1.bf16.msra.mxu0 0
        %1291 = vmatprep.mubr.bf16.mxu0 0
        %1292 = vmatmul.mubr.bf16.gmra.mrb[0].mxu0 %v1257
        %v1293 = vpop.f32.mrb[0].mxu0
        %v1294 = vadd.f32 0.0, %v1293
        %v1295 = vpop.f32.mrb[0].mxu0
        %v1296 = vpop.f32.mrb[0].mxu0
        %v1297 = vadd.f32 0.0, %v1296
        %v1298 = vpop.f32.mrb[0].mxu0
        %1299 = vdwg.mxu0
        %v1301 = vsel %vm1160, %v1250, 0
        %1303 = vmatprep.subr.bf16.mxu0 0
        %1304 = vmatpush1.bf16.msra.mxu0 %v1254
        %1305 = vmatprep.subr.bf16.mxu0 0
        %1306 = vmatpush1.bf16.msra.mxu0 0
        %1307 = vmatprep.subr.bf16.mxu0 0
        %1308 = vmatpush1.bf16.msra.mxu0 0
        %1309 = vmatprep.subr.bf16.mxu0 0
        %1310 = vmatpush1.bf16.msra.mxu0 0
        %1311 = vmatprep.subr.bf16.mxu0 0
        %1312 = vmatpush1.bf16.msra.mxu0 0
        %1313 = vmatprep.subr.bf16.mxu0 0
        %1314 = vmatpush1.bf16.msra.mxu0 0
        %1315 = vmatprep.subr.bf16.mxu0 0
        %1316 = vmatpush1.bf16.msra.mxu0 0
        %1317 = vmatprep.subr.bf16.mxu0 0
        %1318 = vmatpush1.bf16.msra.mxu0 0
        %1319 = vmatprep.subr.bf16.mxu0 0
        %1320 = vmatpush1.bf16.msra.mxu0 0
        %1321 = vmatprep.subr.bf16.mxu0 0
        %1322 = vmatpush1.bf16.msra.mxu0 0
        %1323 = vmatprep.subr.bf16.mxu0 0
        %1324 = vmatpush1.bf16.msra.mxu0 0
        %1325 = vmatprep.subr.bf16.mxu0 0
        %1326 = vmatpush1.bf16.msra.mxu0 0
        %1327 = vmatprep.subr.bf16.mxu0 0
        %1328 = vmatpush1.bf16.msra.mxu0 0
        %1329 = vmatprep.subr.bf16.mxu0 0
        %1330 = vmatpush1.bf16.msra.mxu0 0
        %1331 = vmatprep.subr.bf16.mxu0 0
        %1332 = vmatpush1.bf16.msra.mxu0 0
        %1333 = vmatprep.subr.bf16.mxu0 0
        %1334 = vmatpush1.bf16.msra.mxu0 0
        %1335 = vmatprep.mubr.bf16.mxu0 0
        %1336 = vmatmul.mubr.bf16.gmra.mrb[0].mxu0 %v1301
        %v1337 = vpop.f32.mrb[0].mxu0
        %v1338 = vadd.f32 0.0, %v1337
        %v1339 = vpop.f32.mrb[0].mxu0
        %v1340 = vpop.f32.mrb[0].mxu0
        %v1341 = vadd.f32 0.0, %v1340
        %v1342 = vpop.f32.mrb[0].mxu0
        %1343 = vdwg.mxu0
        %1344 = vrot.lane.b32.xlu0 %v975, 64
        %v1345 = vpop.permute.xlu0 %1344
        %v1348 = vsel %vm1160, %v1251, 0
        %1350 = vmatprep.subr.bf16.mxu0 0
        %1351 = vmatpush1.bf16.msra.mxu0 %v1345
        %1352 = vmatprep.subr.bf16.mxu0 0
        %1353 = vmatpush1.bf16.msra.mxu0 0
        %1354 = vmatprep.subr.bf16.mxu0 0
        %1355 = vmatpush1.bf16.msra.mxu0 0
        %1356 = vmatprep.subr.bf16.mxu0 0
        %1357 = vmatpush1.bf16.msra.mxu0 0
        %1358 = vmatprep.subr.bf16.mxu0 0
        %1359 = vmatpush1.bf16.msra.mxu0 0
        %1360 = vmatprep.subr.bf16.mxu0 0
        %1361 = vmatpush1.bf16.msra.mxu0 0
        %1362 = vmatprep.subr.bf16.mxu0 0
        %1363 = vmatpush1.bf16.msra.mxu0 0
        %1364 = vmatprep.subr.bf16.mxu0 0
        %1365 = vmatpush1.bf16.msra.mxu0 0
        %1366 = vmatprep.subr.bf16.mxu0 0
        %1367 = vmatpush1.bf16.msra.mxu0 0
        %1368 = vmatprep.subr.bf16.mxu0 0
        %1369 = vmatpush1.bf16.msra.mxu0 0
        %1370 = vmatprep.subr.bf16.mxu0 0
        %1371 = vmatpush1.bf16.msra.mxu0 0
        %1372 = vmatprep.subr.bf16.mxu0 0
        %1373 = vmatpush1.bf16.msra.mxu0 0
        %1374 = vmatprep.subr.bf16.mxu0 0
        %1375 = vmatpush1.bf16.msra.mxu0 0
        %1376 = vmatprep.subr.bf16.mxu0 0
        %1377 = vmatpush1.bf16.msra.mxu0 0
        %1378 = vmatprep.subr.bf16.mxu0 0
        %1379 = vmatpush1.bf16.msra.mxu0 0
        %1380 = vmatprep.subr.bf16.mxu0 0
        %1381 = vmatpush1.bf16.msra.mxu0 0
        %1382 = vmatprep.mubr.bf16.mxu0 0
        %1383 = vmatmul.mubr.bf16.gmra.mrb[0].mxu0 %v1348
        %v1384 = vpop.f32.mrb[0].mxu0
        %v1385 = vadd.f32 0.0, %v1384
        %v1386 = vpop.f32.mrb[0].mxu0
        %v1387 = vpop.f32.mrb[0].mxu0
        %v1388 = vadd.f32 0.0, %v1387
        %v1389 = vpop.f32.mrb[0].mxu0
        %1390 = vdwg.mxu0
        %v1392 = vsel %vm1160, %v1252, 0
        %1394 = vmatprep.subr.bf16.mxu0 0
        %1395 = vmatpush1.bf16.msra.mxu0 %v1345
        %1396 = vmatprep.subr.bf16.mxu0 0
        %1397 = vmatpush1.bf16.msra.mxu0 0
        %1398 = vmatprep.subr.bf16.mxu0 0
        %1399 = vmatpush1.bf16.msra.mxu0 0
        %1400 = vmatprep.subr.bf16.mxu0 0
        %1401 = vmatpush1.bf16.msra.mxu0 0
        %1402 = vmatprep.subr.bf16.mxu0 0
        %1403 = vmatpush1.bf16.msra.mxu0 0
        %1404 = vmatprep.subr.bf16.mxu0 0
        %1405 = vmatpush1.bf16.msra.mxu0 0
        %1406 = vmatprep.subr.bf16.mxu0 0
        %1407 = vmatpush1.bf16.msra.mxu0 0
        %1408 = vmatprep.subr.bf16.mxu0 0
        %1409 = vmatpush1.bf16.msra.mxu0 0
        %1410 = vmatprep.subr.bf16.mxu0 0
        %1411 = vmatpush1.bf16.msra.mxu0 0
        %1412 = vmatprep.subr.bf16.mxu0 0
        %1413 = vmatpush1.bf16.msra.mxu0 0
        %1414 = vmatprep.subr.bf16.mxu0 0
        %1415 = vmatpush1.bf16.msra.mxu0 0
        %1416 = vmatprep.subr.bf16.mxu0 0
        %1417 = vmatpush1.bf16.msra.mxu0 0
        %1418 = vmatprep.subr.bf16.mxu0 0
        %1419 = vmatpush1.bf16.msra.mxu0 0
        %1420 = vmatprep.subr.bf16.mxu0 0
        %1421 = vmatpush1.bf16.msra.mxu0 0
        %1422 = vmatprep.subr.bf16.mxu0 0
        %1423 = vmatpush1.bf16.msra.mxu0 0
        %1424 = vmatprep.subr.bf16.mxu0 0
        %1425 = vmatpush1.bf16.msra.mxu0 0
        %1426 = vmatprep.mubr.bf16.mxu0 0
        %1427 = vmatmul.mubr.bf16.gmra.mrb[0].mxu0 %v1392
        %v1428 = vpop.f32.mrb[0].mxu0
        %v1429 = vadd.f32 0.0, %v1428
        %v1430 = vpop.f32.mrb[0].mxu0
        %v1431 = vpop.f32.mrb[0].mxu0
        %v1432 = vadd.f32 0.0, %v1431
        %v1433 = vpop.f32.mrb[0].mxu0
        %1434 = vdwg.mxu0
        %1437 = vrot.lane.b32.xlu0 %v1338, 32
        %v1438 = vpop.permute.xlu0 %1437
        %1439 = vrot.lane.b32.xlu0 %v1341, 32
        %v1440 = vpop.permute.xlu0 %1439
        %1445 = vrot.lane.b32.xlu0 %v1385, 64
        %v1446 = vpop.permute.xlu0 %1445
        %1447 = vrot.lane.b32.xlu0 %v1388, 64
        %v1448 = vpop.permute.xlu0 %1447
        %1453 = vrot.lane.b32.xlu0 %v1429, 96
        %v1454 = vpop.permute.xlu0 %1453
        %1455 = vrot.lane.b32.xlu0 %v1432, 96
        %v1456 = vpop.permute.xlu0 %1455
        %v1459 = vsel %vm978, %v1294, %v1438
        %v1460 = vsel %vm978, %v1297, %v1440
        %v1461 = vsel %vm899, %v1459, %v1446
        %v1462 = vsel %vm899, %v1460, %v1448
        %vm1463 = vcmask 785408
        %v1464 = vsel %vm1463, %v1461, %v1454
        %v1465 = vsel %vm1463, %v1462, %v1456
        %v1466 = vpack.c.bf16 %v1465, %v1464
        %v1467 = vld [vmem:[#allocation7] sm:$0xf]
        %v1468 = vld [vmem:[#allocation7 + $0x4] sm:$0xf]
        %v1469 = vld [vmem:[#allocation7 + $0x8] sm:$0xf]
        %v1470 = vld [vmem:[#allocation7 + $0xc] sm:$0xf]
        %v1471 = vld [vmem:[#allocation7 + $0x10] sm:$0xf]
        %v1472 = vld [vmem:[#allocation7 + $0x14] sm:$0xf]
        %v1473 = vld [vmem:[#allocation7 + $0x18] sm:$0xf]
        %v1474 = vld [vmem:[#allocation7 + $0x1c] sm:$0xf]
        %v1475 = vld [vmem:[#allocation7 + $0x20] sm:$0xf]
        %v1476 = vld [vmem:[#allocation7 + $0x24] sm:$0xf]
        %v1477 = vld [vmem:[#allocation7 + $0x28] sm:$0xf]
        %v1478 = vld [vmem:[#allocation7 + $0x2c] sm:$0xf]
        %v1479 = vld [vmem:[#allocation7 + $0x30] sm:$0xf]
        %v1480 = vld [vmem:[#allocation7 + $0x34] sm:$0xf]
        %v1481 = vld [vmem:[#allocation7 + $0x38] sm:$0xf]
        %v1482 = vld [vmem:[#allocation7 + $0x3c] sm:$0xf]
        %v1483 = vld [vmem:[%s4] sm:$0x1]
        %v1485 = vlaneseq
        %v1486 = vshrl.u32 %v1485, 7
        %v1487 = vsub.s32 0, %v1486
        %v1488 = vrot.slane %v1483, %v1487
        %v1506 = vunpack.c.l.b16 %v1467
        %v1507 = vunpack.c.l.b16 %v1468
        %v1508 = vunpack.c.l.b16 %v1469
        %v1509 = vunpack.c.l.b16 %v1470
        %v1510 = vunpack.c.l.b16 %v1471
        %v1511 = vunpack.c.l.b16 %v1472
        %v1512 = vunpack.c.l.b16 %v1473
        %v1513 = vunpack.c.l.b16 %v1474
        %v1514 = vunpack.c.l.b16 %v1475
        %v1515 = vunpack.c.l.b16 %v1476
        %v1516 = vunpack.c.l.b16 %v1477
        %v1517 = vunpack.c.l.b16 %v1478
        %v1518 = vunpack.c.l.b16 %v1479
        %v1519 = vunpack.c.l.b16 %v1480
        %v1520 = vunpack.c.l.b16 %v1481
        %v1521 = vunpack.c.l.b16 %v1482
        %v1522 = vpack.c.b16 %v1507, %v1506
        %v1523 = vpack.c.b16 %v1509, %v1508
        %v1524 = vpack.c.b16 %v1511, %v1510
        %v1525 = vpack.c.b16 %v1513, %v1512
        %v1526 = vpack.c.b16 %v1515, %v1514
        %v1527 = vpack.c.b16 %v1517, %v1516
        %v1528 = vpack.c.b16 %v1519, %v1518
        %v1529 = vpack.c.b16 %v1521, %v1520
        %1538 = vmatprep.subr.bf16.mxu0 0
        %1539 = vmatpush1.bf16.msra.mxu0 %v1522
        %1540 = vmatprep.subr.bf16.mxu0 0
        %1541 = vmatpush1.bf16.msra.mxu0 %v1523
        %1542 = vmatprep.subr.bf16.mxu0 0
        %1543 = vmatpush1.bf16.msra.mxu0 %v1524
        %1544 = vmatprep.subr.bf16.mxu0 0
        %1545 = vmatpush1.bf16.msra.mxu0 %v1525
        %1546 = vmatprep.subr.bf16.mxu0 0
        %1547 = vmatpush1.bf16.msra.mxu0 %v1526
        %1548 = vmatprep.subr.bf16.mxu0 0
        %1549 = vmatpush1.bf16.msra.mxu0 %v1527
        %1550 = vmatprep.subr.bf16.mxu0 0
        %1551 = vmatpush1.bf16.msra.mxu0 %v1528
        %1552 = vmatprep.subr.bf16.mxu0 0
        %1553 = vmatpush1.bf16.msra.mxu0 %v1529
        %1554 = vmatprep.subr.bf16.mxu0 0
        %1555 = vmatpush1.bf16.msra.mxu0 0
        %1556 = vmatprep.subr.bf16.mxu0 0
        %1557 = vmatpush1.bf16.msra.mxu0 0
        %1558 = vmatprep.subr.bf16.mxu0 0
        %1559 = vmatpush1.bf16.msra.mxu0 0
        %1560 = vmatprep.subr.bf16.mxu0 0
        %1561 = vmatpush1.bf16.msra.mxu0 0
        %1562 = vmatprep.subr.bf16.mxu0 0
        %1563 = vmatpush1.bf16.msra.mxu0 0
        %1564 = vmatprep.subr.bf16.mxu0 0
        %1565 = vmatpush1.bf16.msra.mxu0 0
        %1566 = vmatprep.subr.bf16.mxu0 0
        %1567 = vmatpush1.bf16.msra.mxu0 0
        %1568 = vmatprep.subr.bf16.mxu0 0
        %1569 = vmatpush1.bf16.msra.mxu0 0
        %1570 = vmatprep.mubr.bf16.mxu0 0
        %1571 = vmatmul.mubr.bf16.gmra.mrb[0].mxu0 %v1466
        %v1572 = vpop.f32.mrb[0].mxu0
        %v1573 = vadd.f32 %v1488, %v1572
        %v1574 = vpop.f32.mrb[0].mxu0
        %v1575 = vpop.f32.mrb[0].mxu0
        %v1576 = vadd.f32 %v1488, %v1575
        %v1577 = vpop.f32.mrb[0].mxu0
        %1578 = vdwg.mxu0
        %v1579 = vpack.c.bf16 %v1576, %v1573
        %v1581 = vunpack.c.l.b16 %v1579
        %v1582 = vunpack.c.h.b16 %v1579
        %v1583 = vpack.c.b16 %v1581, %v1581
        %v1584 = vpack.c.b16 %v1582, %v1582
        %1587 = vst [vmem:[%s578] sm:$0xf] %v1583
        %1588 = vst [vmem:[%s578 + $0x4] sm:$0xf] %v1584
        %s1589 = sand.u32 %s303, 1
        %s1590 = scalar_lea.sflag [#allocation4], %s1589
        %s1591 = sand.u32 %s303, 1
        %s1592 = smul.addr %s1591, 8
        %s1593 = scalar_lea.vmem [#allocation17], %s1592
        %s1594 = sand.u32 %s329, 1
        %s1595 = scalar_lea.sflag [#allocation19], %s1594
        %s1596 = sand.u32 %s329, 1
        %s1597 = smul.addr %s1596, 8
        %s1598 = scalar_lea.vmem [#allocation18], %s1597
        // Predicated region
        $region105: #{tpu_custom_call.1} parent=67 // pred_check
          %p1599 = pneg %p313
        $region106: #{tpu_custom_call.1} parent=67 // pred_check_branch
          %1601 = sbr.rel (%p1599) target = $region108
        $region107: #{tpu_custom_call.1} parent=67 // pred_region
          %s1603 = ssub.s32 128, 128
          %1604 = vsyncadd %s1590, %s1603
          %s1605 = smul.addr %s38, 2
          %s1606 = smul.addr %s1605, 64
          %s1607 = scalar_lea.hbm %s12, %s1606
          %s1608 = sshll.u32 %s1593, 4
          %s1609 = int_to_ptr.vmem [resolvable:$true] %s1608
          %1614 = dma.vmem_to_hbm [thread:$0]  %s1609, 128, %s1607, %s1590, 64, 64, 4
        $region108: #{tpu_custom_call.1} parent=67 // pred_fallthru
          _
        // Predicated region
        $region109: #{tpu_custom_call.1} parent=67 // pred_check
          %p1615 = pneg %p339
        $region110: #{tpu_custom_call.1} parent=67 // pred_check_branch
          %1617 = sbr.rel (%p1615) target = $region112
        $region111: #{tpu_custom_call.1} parent=67 // pred_region
          %s1619 = ssub.s32 128, 128
          %1620 = vsyncadd %s1595, %s1619
          %s1621 = smul.addr %s38, 2
          %s1622 = smul.addr %s1621, 64
          %s1623 = scalar_lea.hbm %s13, %s1622
          %s1624 = sshll.u32 %s1598, 4
          %s1625 = int_to_ptr.vmem [resolvable:$true] %s1624
          %1630 = dma.vmem_to_hbm [thread:$0]  %s1625, 128, %s1623, %s1595, 64, 64, 4
        $region112: #{tpu_custom_call.1} parent=67 // pred_fallthru
          _
      $region68: #{tpu_custom_call.1} parent=5 // pred_fallthru
        _
      %p1631 = scmp.le.s32.totalorder 2, %s33
      // Predicated region
      $region113: #{tpu_custom_call.1} parent=5 // pred_check
        %p1632 = pneg %p1631
      $region114: #{tpu_custom_call.1} parent=5 // pred_check_branch
        %1634 = sbr.rel (%p1632) target = $region116
      $region115: #{tpu_custom_call.1} parent=5 // pred_region
        %s1635 = ssub.s32 %s33, 2
        // Predicated region
        $region117: #{tpu_custom_call.1} parent=115 // pred_check
          %p1636 = pneg %p319
        $region118: #{tpu_custom_call.1} parent=115 // pred_check_branch
          %1638 = sbr.rel (%p1636) target = $region120
        $region119: #{tpu_custom_call.1} parent=115 // pred_region
          %s1639 = sand.u32 %s304, 1
          %s1640 = scalar_lea.sflag [#allocation4], %s1639
          %s1641 = sand.u32 %s304, 1
          %s1642 = smul.addr %s1641, 8
          %s1643 = scalar_lea.vmem [#allocation17], %s1642
          %1644 = dma.done %s1640, 128
        $region120: #{tpu_custom_call.1} parent=115 // pred_fallthru
          _
        // Predicated region
        $region121: #{tpu_custom_call.1} parent=115 // pred_check
          %p1645 = pneg %p345
        $region122: #{tpu_custom_call.1} parent=115 // pred_check_branch
          %1647 = sbr.rel (%p1645) target = $region124
        $region123: #{tpu_custom_call.1} parent=115 // pred_region
          %s1648 = sand.u32 %s330, 1
          %s1649 = scalar_lea.sflag [#allocation19], %s1648
          %s1650 = sand.u32 %s330, 1
          %s1651 = smul.addr %s1650, 8
          %s1652 = scalar_lea.vmem [#allocation18], %s1651
          %1653 = dma.done %s1649, 128
        $region124: #{tpu_custom_call.1} parent=115 // pred_fallthru
          _
      $region116: #{tpu_custom_call.1} parent=5 // pred_fallthru
        _
    $region6: #{tpu_custom_call.1} parent=1 // loop_footer
      %s37 = sadd.s32 1, %s33
    $region7: #{tpu_custom_call.1} parent=1 // loop_footer_branch
      %32 = sbr.rel target = $region3
    $region8: #{tpu_custom_call.1} parent=1 // loop_exit
      _
    %1654 = vsyncpa [#allocation3], 1
    %s1655 = scalar_lea.sflag [#allocation3], 1
    %1656 = vsyncpa %s1655, 1
    %1657 = vsyncpa [#allocation6], 1
    %1658 = vsyncpa [#allocation9], 1
    %1659 = vsyncpa [#allocation12], 1
    %1660 = vsyncpa [#allocation15], 1
    %1661 = vsyncpa [#allocation4], 1
    %s1662 = scalar_lea.sflag [#allocation4], 1
    %1663 = vsyncpa %s1662, 1
    %1664 = vsyncpa [#allocation19], 1
    %s1665 = scalar_lea.sflag [#allocation19], 1
    %1666 = vsyncpa %s1665, 1

</llo_original>
